<compile_context>
chip_gen: v7x
topology: tpu7x:2x2x1
jax: 0.10.0
libtpu: 0.0.40
codegen_flags: <defaults>
</compile_context>

<pallas_src>
import jax
import jax.numpy as jnp
from jax import lax
from jax.experimental import pallas as pl
from jax.experimental.pallas import tpu as pltpu


def _make_kernel(num_layers, window, hidden, out_features, batch):
    """Kernel closed over the static sizes (layers/time fully unrolled)."""
    T, H, B, O = window, hidden, batch, out_features

    def kernel(*refs):
        x_ref = refs[0]                               # (T*B, I)  bf16, time-major
        layer_refs = refs[1:1 + 3 * num_layers]       # per layer: w_ih.T, w_hh.T (bf16), bias (f32)
        wlin_ref = refs[1 + 3 * num_layers]           # (T*H, O)  bf16
        blin_ref = refs[2 + 3 * num_layers]           # (1, O)    f32
        out_ref = refs[3 + 3 * num_layers]            # (B, O)    f32

        # Lane mask selecting the 'g' gate band (hoisted: constant across layers/steps).
        lane = lax.broadcasted_iota(jnp.int32, (B, 4 * H), 1)
        g_band = (lane >= 2 * H) & (lane < 3 * H)

        wlin = wlin_ref[...]                          # loaded once
        acc = jnp.zeros((B, O), jnp.float32)          # fused-Linear accumulator

        layer_in = x_ref[...]                         # (T*B, F_in)
        for l in range(num_layers):
            w_ih = layer_refs[3 * l][...]             # (F_in, 4H) bf16
            w_hh = layer_refs[3 * l + 1][...]         # (H, 4H)    bf16
            bias = layer_refs[3 * l + 2][...]         # (1, 4H)    f32 = b_ih + b_hh

            # Hoisted input projection for all timesteps at once, bias folded in.
            xproj = jnp.dot(layer_in.astype(jnp.bfloat16), w_ih,
                            preferred_element_type=jnp.float32) + bias   # (T*B, 4H) f32

            h = jnp.zeros((B, H), jnp.float32)
            c = jnp.zeros((B, H), jnp.float32)
            last = (l == num_layers - 1)
            outs = []
            for t in range(window):
                gates = xproj[t * B:(t + 1) * B, :] + jnp.dot(
                    h.astype(jnp.bfloat16), w_hh,
                    preferred_element_type=jnp.float32)                  # (B, 4H)
                # Full-vreg activations: one sigmoid + one tanh over all 128 lanes,
                # then select the tanh ('g') band with the lane mask.
                s = jax.nn.sigmoid(gates)
                tg = jnp.tanh(gates)
                act = jnp.where(g_band, tg, s)
                i_g = act[:, 0:H]
                f_g = act[:, H:2 * H]
                g_g = act[:, 2 * H:3 * H]
                o_g = act[:, 3 * H:4 * H]
                c = f_g * c + i_g * g_g
                h = o_g * jnp.tanh(c)
                if last:
                    # Fused final Linear: flat (B, T*H) @ W.T == sum_t h_t @ W.T[t*H:(t+1)*H]
                    acc = acc + jnp.dot(h.astype(jnp.bfloat16),
                                        wlin[t * H:(t + 1) * H, :],
                                        preferred_element_type=jnp.float32)
                else:
                    outs.append(h)
            if not last:
                layer_in = jnp.concatenate(outs, axis=0)                 # (T*B, H)

        out_ref[...] = acc + blin_ref[...]

    return kernel


def sequence_lstm_forward(x, lstm_params, w_lin, b_lin, *, hidden, out_features):
    """x: (B, T, I).  lstm_params: list of (w_ih, w_hh, b_ih, b_hh) per layer,
    with torch shapes (4H, F_in), (4H, H), (4H,), (4H,).  w_lin: (O, T*H)."""
    B, T, I = x.shape
    L = len(lstm_params)
    H = hidden

    # Time-major, contiguous (T*B, I), bf16 for MXU feeding (done once in XLA).
    x_tm = (jnp.transpose(jnp.asarray(x, jnp.float32), (1, 0, 2))
            .reshape(T * B, I).astype(jnp.bfloat16))

    flat_weights = []
    for (w_ih, w_hh, b_ih, b_hh) in lstm_params:
        flat_weights.append(jnp.asarray(w_ih, jnp.float32).T.astype(jnp.bfloat16))  # (F_in, 4H)
        flat_weights.append(jnp.asarray(w_hh, jnp.float32).T.astype(jnp.bfloat16))  # (H, 4H)
        flat_weights.append((jnp.asarray(b_ih, jnp.float32)
                             + jnp.asarray(b_hh, jnp.float32))[None, :])            # (1, 4H) f32
    w_lin_t = jnp.asarray(w_lin, jnp.float32).T.astype(jnp.bfloat16)                # (T*H, O)
    b_lin2 = jnp.asarray(b_lin, jnp.float32)[None, :]                               # (1, O)

    kernel = _make_kernel(L, T, H, out_features, B)
    n_in = 1 + 3 * L + 2
    vmem = pl.BlockSpec(memory_space=pltpu.MemorySpace.VMEM)

    # Whole problem (~100-200 KB padded) fits VMEM on every generation: no grid,
    # no scratch, full-array VMEM BlockSpecs.
    return pl.pallas_call(
        kernel,
        out_shape=jax.ShapeDtypeStruct((B, out_features), jnp.float32),
        in_specs=[vmem] * n_in,
        out_specs=vmem,
    )(x_tm, *flat_weights, w_lin_t, b_lin2)


def sequence_lstm_reference(x, lstm_params, w_lin, b_lin):
    """Pure-JAX f32 reference matching torch.nn.LSTM + Linear semantics."""
    B, T, _ = x.shape
    seq = x
    for (w_ih, w_hh, b_ih, b_hh) in lstm_params:
        H = w_hh.shape[1]
        h = jnp.zeros((B, H), jnp.float32)
        c = jnp.zeros((B, H), jnp.float32)
        outs = []
        for t in range(T):
            gates = seq[:, t, :] @ w_ih.T + b_ih + h @ w_hh.T + b_hh
            i, f, g, o = jnp.split(gates, 4, axis=-1)
            i, f, g, o = jax.nn.sigmoid(i), jax.nn.sigmoid(f), jnp.tanh(g), jax.nn.sigmoid(o)
            c = f * c + i * g
            h = o * jnp.tanh(c)
            outs.append(h)
        seq = jnp.stack(outs, axis=1)
    flat = seq.reshape(B, -1)
    return flat @ w_lin.T + b_lin


if __name__ == "__main__":
    # Module hyperparameters (small, TPU-friendly)
    batch_size = 8          # batch_size
    window_size = 8         # window_size (sequence length)
    input_features = 16     # input_feature_count
    hidden_size = 32        # hidden_size
    layer_count = 2         # layer_count
    output_features = 16    # output_feature_count

    key = jax.random.PRNGKey(0)
    k = 1.0 / jnp.sqrt(hidden_size)

    def uni(key, shape):
        return jax.random.uniform(key, shape, jnp.float32, -k, k)

    # Deterministic parameter init (PyTorch-style uniform(-1/sqrt(H), 1/sqrt(H)))
    lstm_params = []
    for l in range(layer_count):
        f_in = input_features if l == 0 else hidden_size
        key, k1, k2, k3, k4 = jax.random.split(key, 5)
        lstm_params.append((
            uni(k1, (4 * hidden_size, f_in)),        # w_ih
            uni(k2, (4 * hidden_size, hidden_size)), # w_hh
            uni(k3, (4 * hidden_size,)),             # b_ih
            uni(k4, (4 * hidden_size,)),             # b_hh
        ))
    key, k1, k2, k3 = jax.random.split(key, 4)
    w_lin = uni(k1, (output_features, window_size * hidden_size))
    b_lin = uni(k2, (output_features,))

    # Input data: (batch, window, input_features)
    x = jax.random.normal(k3, (batch_size, window_size, input_features), jnp.float32)

    out = sequence_lstm_forward(x, lstm_params, w_lin, b_lin,
                                hidden=hidden_size, out_features=output_features)
    out = jax.block_until_ready(out)

    ref = sequence_lstm_reference(x, lstm_params, w_lin, b_lin)
    assert out.shape == (batch_size, output_features)
    # bf16 MXU operands (f32 accumulation) -> slightly looser tolerance vs f32 reference.
    assert jnp.allclose(out, ref, atol=5e-2, rtol=5e-2), (
        "kernel/reference mismatch: max abs err = "
        f"{float(jnp.max(jnp.abs(out - ref)))}")

    print("KERNEL_OK")
</pallas_src>

<mosaic_0001>
module attributes {stable_mosaic.version = 11 : i64} {
  func.func @kernel(%arg0: memref<64x16xbf16, #tpu.memory_space<vmem>>, %arg1: memref<16x128xbf16, #tpu.memory_space<vmem>>, %arg2: memref<32x128xbf16, #tpu.memory_space<vmem>>, %arg3: memref<1x128xf32, #tpu.memory_space<vmem>>, %arg4: memref<32x128xbf16, #tpu.memory_space<vmem>>, %arg5: memref<32x128xbf16, #tpu.memory_space<vmem>>, %arg6: memref<1x128xf32, #tpu.memory_space<vmem>>, %arg7: memref<256x16xbf16, #tpu.memory_space<vmem>>, %arg8: memref<1x16xf32, #tpu.memory_space<vmem>>, %arg9: memref<8x16xf32, #tpu.memory_space<vmem>>) attributes {dimension_semantics = [], scalar_prefetch = 0 : i64, scratch_operands = 0 : i64, tpu.core_type = #tpu.core_type<tc>} {
    %0 = tpu.iota {dimensions = array<i32: 1>} : vector<8x128xi32>
    %c64_i32 = arith.constant 64 : i32
    %1 = vector.broadcast %c64_i32 : i32 to vector<8x128xi32>
    %2 = arith.cmpi sge, %0, %1 : vector<8x128xi32>
    %c96_i32 = arith.constant 96 : i32
    %3 = vector.broadcast %c96_i32 : i32 to vector<8x128xi32>
    %4 = arith.cmpi slt, %0, %3 : vector<8x128xi32>
    %5 = arith.andi %2, %4 : vector<8x128xi1>
    %c0 = arith.constant 0 : index
    %c0_0 = arith.constant 0 : index
    %6 = vector.load %arg7[%c0, %c0_0] : memref<256x16xbf16, #tpu.memory_space<vmem>>, vector<256x16xbf16>
    %cst = arith.constant 0.000000e+00 : f32
    %7 = vector.broadcast %cst : f32 to vector<8x16xf32>
    %c0_1 = arith.constant 0 : index
    %c0_2 = arith.constant 0 : index
    %8 = vector.load %arg0[%c0_1, %c0_2] : memref<64x16xbf16, #tpu.memory_space<vmem>>, vector<64x16xbf16>
    %c0_3 = arith.constant 0 : index
    %c0_4 = arith.constant 0 : index
    %9 = vector.load %arg1[%c0_3, %c0_4] : memref<16x128xbf16, #tpu.memory_space<vmem>>, vector<16x128xbf16>
    %c0_5 = arith.constant 0 : index
    %c0_6 = arith.constant 0 : index
    %10 = vector.load %arg2[%c0_5, %c0_6] : memref<32x128xbf16, #tpu.memory_space<vmem>>, vector<32x128xbf16>
    %c0_7 = arith.constant 0 : index
    %c0_8 = arith.constant 0 : index
    %11 = vector.load %arg3[%c0_7, %c0_8] : memref<1x128xf32, #tpu.memory_space<vmem>>, vector<1x128xf32>
    %cst_9 = arith.constant dense<0.000000e+00> : vector<64x128xf32>
    %12 = tpu.matmul %8, %9, %cst_9 {dimension_numbers = #tpu.dot_dimension_numbers<[1], [0], [0], [1], [0, 0, 1, 1], [], []>} : vector<64x16xbf16>, vector<16x128xbf16>, vector<64x128xf32> -> vector<64x128xf32>
    %13 = vector.broadcast %11 : vector<1x128xf32> to vector<64x128xf32>
    %14 = arith.addf %12, %13 : vector<64x128xf32>
    %cst_10 = arith.constant 0.000000e+00 : f32
    %15 = vector.broadcast %cst_10 : f32 to vector<8x32xf32>
    %cst_11 = arith.constant 0.000000e+00 : f32
    %16 = vector.broadcast %cst_11 : f32 to vector<8x32xf32>
    %17 = vector.extract_strided_slice %14 {offsets = [0, 0], sizes = [8, 128], strides = [1, 1]} : vector<64x128xf32> to vector<8x128xf32>
    %18 = arith.truncf %15 : vector<8x32xf32> to vector<8x32xbf16>
    %cst_12 = arith.constant dense<0.000000e+00> : vector<8x128xf32>
    %19 = tpu.matmul %18, %10, %cst_12 {dimension_numbers = #tpu.dot_dimension_numbers<[1], [0], [0], [1], [0, 0, 1, 1], [], []>} : vector<8x32xbf16>, vector<32x128xbf16>, vector<8x128xf32> -> vector<8x128xf32>
    %20 = arith.addf %17, %19 : vector<8x128xf32>
    %21 = arith.negf %20 : vector<8x128xf32>
    %22 = math.exp %21 : vector<8x128xf32>
    %cst_13 = arith.constant 1.000000e+00 : f32
    %23 = vector.broadcast %cst_13 : f32 to vector<8x128xf32>
    %24 = arith.addf %23, %22 : vector<8x128xf32>
    %25 = arith.divf %23, %24 : vector<8x128xf32>
    %26 = math.tanh %20 : vector<8x128xf32>
    %27 = arith.select %5, %26, %25 : vector<8x128xi1>, vector<8x128xf32>
    %28 = vector.extract_strided_slice %27 {offsets = [0, 0], sizes = [8, 32], strides = [1, 1]} : vector<8x128xf32> to vector<8x32xf32>
    %29 = vector.extract_strided_slice %27 {offsets = [0, 32], sizes = [8, 32], strides = [1, 1]} : vector<8x128xf32> to vector<8x32xf32>
    %30 = vector.extract_strided_slice %27 {offsets = [0, 64], sizes = [8, 32], strides = [1, 1]} : vector<8x128xf32> to vector<8x32xf32>
    %31 = vector.extract_strided_slice %27 {offsets = [0, 96], sizes = [8, 32], strides = [1, 1]} : vector<8x128xf32> to vector<8x32xf32>
    %32 = arith.mulf %29, %16 : vector<8x32xf32>
    %33 = arith.mulf %28, %30 : vector<8x32xf32>
    %34 = arith.addf %32, %33 : vector<8x32xf32>
    %35 = math.tanh %34 : vector<8x32xf32>
    %36 = arith.mulf %31, %35 : vector<8x32xf32>
    %37 = vector.extract_strided_slice %14 {offsets = [8, 0], sizes = [8, 128], strides = [1, 1]} : vector<64x128xf32> to vector<8x128xf32>
    %38 = arith.truncf %36 : vector<8x32xf32> to vector<8x32xbf16>
    %cst_14 = arith.constant dense<0.000000e+00> : vector<8x128xf32>
    %39 = tpu.matmul %38, %10, %cst_14 {dimension_numbers = #tpu.dot_dimension_numbers<[1], [0], [0], [1], [0, 0, 1, 1], [], []>} : vector<8x32xbf16>, vector<32x128xbf16>, vector<8x128xf32> -> vector<8x128xf32>
    %40 = arith.addf %37, %39 : vector<8x128xf32>
    %41 = arith.negf %40 : vector<8x128xf32>
    %42 = math.exp %41 : vector<8x128xf32>
    %cst_15 = arith.constant 1.000000e+00 : f32
    %43 = vector.broadcast %cst_15 : f32 to vector<8x128xf32>
    %44 = arith.addf %43, %42 : vector<8x128xf32>
    %45 = arith.divf %43, %44 : vector<8x128xf32>
    %46 = math.tanh %40 : vector<8x128xf32>
    %47 = arith.select %5, %46, %45 : vector<8x128xi1>, vector<8x128xf32>
    %48 = vector.extract_strided_slice %47 {offsets = [0, 0], sizes = [8, 32], strides = [1, 1]} : vector<8x128xf32> to vector<8x32xf32>
    %49 = vector.extract_strided_slice %47 {offsets = [0, 32], sizes = [8, 32], strides = [1, 1]} : vector<8x128xf32> to vector<8x32xf32>
    %50 = vector.extract_strided_slice %47 {offsets = [0, 64], sizes = [8, 32], strides = [1, 1]} : vector<8x128xf32> to vector<8x32xf32>
    %51 = vector.extract_strided_slice %47 {offsets = [0, 96], sizes = [8, 32], strides = [1, 1]} : vector<8x128xf32> to vector<8x32xf32>
    %52 = arith.mulf %49, %34 : vector<8x32xf32>
    %53 = arith.mulf %48, %50 : vector<8x32xf32>
    %54 = arith.addf %52, %53 : vector<8x32xf32>
    %55 = math.tanh %54 : vector<8x32xf32>
    %56 = arith.mulf %51, %55 : vector<8x32xf32>
    %57 = vector.extract_strided_slice %14 {offsets = [16, 0], sizes = [8, 128], strides = [1, 1]} : vector<64x128xf32> to vector<8x128xf32>
    %58 = arith.truncf %56 : vector<8x32xf32> to vector<8x32xbf16>
    %cst_16 = arith.constant dense<0.000000e+00> : vector<8x128xf32>
    %59 = tpu.matmul %58, %10, %cst_16 {dimension_numbers = #tpu.dot_dimension_numbers<[1], [0], [0], [1], [0, 0, 1, 1], [], []>} : vector<8x32xbf16>, vector<32x128xbf16>, vector<8x128xf32> -> vector<8x128xf32>
    %60 = arith.addf %57, %59 : vector<8x128xf32>
    %61 = arith.negf %60 : vector<8x128xf32>
    %62 = math.exp %61 : vector<8x128xf32>
    %cst_17 = arith.constant 1.000000e+00 : f32
    %63 = vector.broadcast %cst_17 : f32 to vector<8x128xf32>
    %64 = arith.addf %63, %62 : vector<8x128xf32>
    %65 = arith.divf %63, %64 : vector<8x128xf32>
    %66 = math.tanh %60 : vector<8x128xf32>
    %67 = arith.select %5, %66, %65 : vector<8x128xi1>, vector<8x128xf32>
    %68 = vector.extract_strided_slice %67 {offsets = [0, 0], sizes = [8, 32], strides = [1, 1]} : vector<8x128xf32> to vector<8x32xf32>
    %69 = vector.extract_strided_slice %67 {offsets = [0, 32], sizes = [8, 32], strides = [1, 1]} : vector<8x128xf32> to vector<8x32xf32>
    %70 = vector.extract_strided_slice %67 {offsets = [0, 64], sizes = [8, 32], strides = [1, 1]} : vector<8x128xf32> to vector<8x32xf32>
    %71 = vector.extract_strided_slice %67 {offsets = [0, 96], sizes = [8, 32], strides = [1, 1]} : vector<8x128xf32> to vector<8x32xf32>
    %72 = arith.mulf %69, %54 : vector<8x32xf32>
    %73 = arith.mulf %68, %70 : vector<8x32xf32>
    %74 = arith.addf %72, %73 : vector<8x32xf32>
    %75 = math.tanh %74 : vector<8x32xf32>
    %76 = arith.mulf %71, %75 : vector<8x32xf32>
    %77 = vector.extract_strided_slice %14 {offsets = [24, 0], sizes = [8, 128], strides = [1, 1]} : vector<64x128xf32> to vector<8x128xf32>
    %78 = arith.truncf %76 : vector<8x32xf32> to vector<8x32xbf16>
    %cst_18 = arith.constant dense<0.000000e+00> : vector<8x128xf32>
    %79 = tpu.matmul %78, %10, %cst_18 {dimension_numbers = #tpu.dot_dimension_numbers<[1], [0], [0], [1], [0, 0, 1, 1], [], []>} : vector<8x32xbf16>, vector<32x128xbf16>, vector<8x128xf32> -> vector<8x128xf32>
    %80 = arith.addf %77, %79 : vector<8x128xf32>
    %81 = arith.negf %80 : vector<8x128xf32>
    %82 = math.exp %81 : vector<8x128xf32>
    %cst_19 = arith.constant 1.000000e+00 : f32
    %83 = vector.broadcast %cst_19 : f32 to vector<8x128xf32>
    %84 = arith.addf %83, %82 : vector<8x128xf32>
    %85 = arith.divf %83, %84 : vector<8x128xf32>
    %86 = math.tanh %80 : vector<8x128xf32>
    %87 = arith.select %5, %86, %85 : vector<8x128xi1>, vector<8x128xf32>
    %88 = vector.extract_strided_slice %87 {offsets = [0, 0], sizes = [8, 32], strides = [1, 1]} : vector<8x128xf32> to vector<8x32xf32>
    %89 = vector.extract_strided_slice %87 {offsets = [0, 32], sizes = [8, 32], strides = [1, 1]} : vector<8x128xf32> to vector<8x32xf32>
    %90 = vector.extract_strided_slice %87 {offsets = [0, 64], sizes = [8, 32], strides = [1, 1]} : vector<8x128xf32> to vector<8x32xf32>
    %91 = vector.extract_strided_slice %87 {offsets = [0, 96], sizes = [8, 32], strides = [1, 1]} : vector<8x128xf32> to vector<8x32xf32>
    %92 = arith.mulf %89, %74 : vector<8x32xf32>
    %93 = arith.mulf %88, %90 : vector<8x32xf32>
    %94 = arith.addf %92, %93 : vector<8x32xf32>
    %95 = math.tanh %94 : vector<8x32xf32>
    %96 = arith.mulf %91, %95 : vector<8x32xf32>
    %97 = vector.extract_strided_slice %14 {offsets = [32, 0], sizes = [8, 128], strides = [1, 1]} : vector<64x128xf32> to vector<8x128xf32>
    %98 = arith.truncf %96 : vector<8x32xf32> to vector<8x32xbf16>
    %cst_20 = arith.constant dense<0.000000e+00> : vector<8x128xf32>
    %99 = tpu.matmul %98, %10, %cst_20 {dimension_numbers = #tpu.dot_dimension_numbers<[1], [0], [0], [1], [0, 0, 1, 1], [], []>} : vector<8x32xbf16>, vector<32x128xbf16>, vector<8x128xf32> -> vector<8x128xf32>
    %100 = arith.addf %97, %99 : vector<8x128xf32>
    %101 = arith.negf %100 : vector<8x128xf32>
    %102 = math.exp %101 : vector<8x128xf32>
    %cst_21 = arith.constant 1.000000e+00 : f32
    %103 = vector.broadcast %cst_21 : f32 to vector<8x128xf32>
    %104 = arith.addf %103, %102 : vector<8x128xf32>
    %105 = arith.divf %103, %104 : vector<8x128xf32>
    %106 = math.tanh %100 : vector<8x128xf32>
    %107 = arith.select %5, %106, %105 : vector<8x128xi1>, vector<8x128xf32>
    %108 = vector.extract_strided_slice %107 {offsets = [0, 0], sizes = [8, 32], strides = [1, 1]} : vector<8x128xf32> to vector<8x32xf32>
    %109 = vector.extract_strided_slice %107 {offsets = [0, 32], sizes = [8, 32], strides = [1, 1]} : vector<8x128xf32> to vector<8x32xf32>
    %110 = vector.extract_strided_slice %107 {offsets = [0, 64], sizes = [8, 32], strides = [1, 1]} : vector<8x128xf32> to vector<8x32xf32>
    %111 = vector.extract_strided_slice %107 {offsets = [0, 96], sizes = [8, 32], strides = [1, 1]} : vector<8x128xf32> to vector<8x32xf32>
    %112 = arith.mulf %109, %94 : vector<8x32xf32>
    %113 = arith.mulf %108, %110 : vector<8x32xf32>
    %114 = arith.addf %112, %113 : vector<8x32xf32>
    %115 = math.tanh %114 : vector<8x32xf32>
    %116 = arith.mulf %111, %115 : vector<8x32xf32>
    %117 = vector.extract_strided_slice %14 {offsets = [40, 0], sizes = [8, 128], strides = [1, 1]} : vector<64x128xf32> to vector<8x128xf32>
    %118 = arith.truncf %116 : vector<8x32xf32> to vector<8x32xbf16>
    %cst_22 = arith.constant dense<0.000000e+00> : vector<8x128xf32>
    %119 = tpu.matmul %118, %10, %cst_22 {dimension_numbers = #tpu.dot_dimension_numbers<[1], [0], [0], [1], [0, 0, 1, 1], [], []>} : vector<8x32xbf16>, vector<32x128xbf16>, vector<8x128xf32> -> vector<8x128xf32>
    %120 = arith.addf %117, %119 : vector<8x128xf32>
    %121 = arith.negf %120 : vector<8x128xf32>
    %122 = math.exp %121 : vector<8x128xf32>
    %cst_23 = arith.constant 1.000000e+00 : f32
    %123 = vector.broadcast %cst_23 : f32 to vector<8x128xf32>
    %124 = arith.addf %123, %122 : vector<8x128xf32>
    %125 = arith.divf %123, %124 : vector<8x128xf32>
    %126 = math.tanh %120 : vector<8x128xf32>
    %127 = arith.select %5, %126, %125 : vector<8x128xi1>, vector<8x128xf32>
    %128 = vector.extract_strided_slice %127 {offsets = [0, 0], sizes = [8, 32], strides = [1, 1]} : vector<8x128xf32> to vector<8x32xf32>
    %129 = vector.extract_strided_slice %127 {offsets = [0, 32], sizes = [8, 32], strides = [1, 1]} : vector<8x128xf32> to vector<8x32xf32>
    %130 = vector.extract_strided_slice %127 {offsets = [0, 64], sizes = [8, 32], strides = [1, 1]} : vector<8x128xf32> to vector<8x32xf32>
    %131 = vector.extract_strided_slice %127 {offsets = [0, 96], sizes = [8, 32], strides = [1, 1]} : vector<8x128xf32> to vector<8x32xf32>
    %132 = arith.mulf %129, %114 : vector<8x32xf32>
    %133 = arith.mulf %128, %130 : vector<8x32xf32>
    %134 = arith.addf %132, %133 : vector<8x32xf32>
    %135 = math.tanh %134 : vector<8x32xf32>
    %136 = arith.mulf %131, %135 : vector<8x32xf32>
    %137 = vector.extract_strided_slice %14 {offsets = [48, 0], sizes = [8, 128], strides = [1, 1]} : vector<64x128xf32> to vector<8x128xf32>
    %138 = arith.truncf %136 : vector<8x32xf32> to vector<8x32xbf16>
    %cst_24 = arith.constant dense<0.000000e+00> : vector<8x128xf32>
    %139 = tpu.matmul %138, %10, %cst_24 {dimension_numbers = #tpu.dot_dimension_numbers<[1], [0], [0], [1], [0, 0, 1, 1], [], []>} : vector<8x32xbf16>, vector<32x128xbf16>, vector<8x128xf32> -> vector<8x128xf32>
    %140 = arith.addf %137, %139 : vector<8x128xf32>
    %141 = arith.negf %140 : vector<8x128xf32>
    %142 = math.exp %141 : vector<8x128xf32>
    %cst_25 = arith.constant 1.000000e+00 : f32
    %143 = vector.broadcast %cst_25 : f32 to vector<8x128xf32>
    %144 = arith.addf %143, %142 : vector<8x128xf32>
    %145 = arith.divf %143, %144 : vector<8x128xf32>
    %146 = math.tanh %140 : vector<8x128xf32>
    %147 = arith.select %5, %146, %145 : vector<8x128xi1>, vector<8x128xf32>
    %148 = vector.extract_strided_slice %147 {offsets = [0, 0], sizes = [8, 32], strides = [1, 1]} : vector<8x128xf32> to vector<8x32xf32>
    %149 = vector.extract_strided_slice %147 {offsets = [0, 32], sizes = [8, 32], strides = [1, 1]} : vector<8x128xf32> to vector<8x32xf32>
    %150 = vector.extract_strided_slice %147 {offsets = [0, 64], sizes = [8, 32], strides = [1, 1]} : vector<8x128xf32> to vector<8x32xf32>
    %151 = vector.extract_strided_slice %147 {offsets = [0, 96], sizes = [8, 32], strides = [1, 1]} : vector<8x128xf32> to vector<8x32xf32>
    %152 = arith.mulf %149, %134 : vector<8x32xf32>
    %153 = arith.mulf %148, %150 : vector<8x32xf32>
    %154 = arith.addf %152, %153 : vector<8x32xf32>
    %155 = math.tanh %154 : vector<8x32xf32>
    %156 = arith.mulf %151, %155 : vector<8x32xf32>
    %157 = vector.extract_strided_slice %14 {offsets = [56, 0], sizes = [8, 128], strides = [1, 1]} : vector<64x128xf32> to vector<8x128xf32>
    %158 = arith.truncf %156 : vector<8x32xf32> to vector<8x32xbf16>
    %cst_26 = arith.constant dense<0.000000e+00> : vector<8x128xf32>
    %159 = tpu.matmul %158, %10, %cst_26 {dimension_numbers = #tpu.dot_dimension_numbers<[1], [0], [0], [1], [0, 0, 1, 1], [], []>} : vector<8x32xbf16>, vector<32x128xbf16>, vector<8x128xf32> -> vector<8x128xf32>
    %160 = arith.addf %157, %159 : vector<8x128xf32>
    %161 = arith.negf %160 : vector<8x128xf32>
    %162 = math.exp %161 : vector<8x128xf32>
    %cst_27 = arith.constant 1.000000e+00 : f32
    %163 = vector.broadcast %cst_27 : f32 to vector<8x128xf32>
    %164 = arith.addf %163, %162 : vector<8x128xf32>
    %165 = arith.divf %163, %164 : vector<8x128xf32>
    %166 = math.tanh %160 : vector<8x128xf32>
    %167 = arith.select %5, %166, %165 : vector<8x128xi1>, vector<8x128xf32>
    %168 = vector.extract_strided_slice %167 {offsets = [0, 0], sizes = [8, 32], strides = [1, 1]} : vector<8x128xf32> to vector<8x32xf32>
    %169 = vector.extract_strided_slice %167 {offsets = [0, 32], sizes = [8, 32], strides = [1, 1]} : vector<8x128xf32> to vector<8x32xf32>
    %170 = vector.extract_strided_slice %167 {offsets = [0, 64], sizes = [8, 32], strides = [1, 1]} : vector<8x128xf32> to vector<8x32xf32>
    %171 = vector.extract_strided_slice %167 {offsets = [0, 96], sizes = [8, 32], strides = [1, 1]} : vector<8x128xf32> to vector<8x32xf32>
    %172 = arith.mulf %169, %154 : vector<8x32xf32>
    %173 = arith.mulf %168, %170 : vector<8x32xf32>
    %174 = arith.addf %172, %173 : vector<8x32xf32>
    %175 = math.tanh %174 : vector<8x32xf32>
    %176 = arith.mulf %171, %175 : vector<8x32xf32>
    %177 = tpu.concatenate %36, %56, %76, %96, %116, %136, %156, %176 in 0 : vector<8x32xf32>, vector<8x32xf32>, vector<8x32xf32>, vector<8x32xf32>, vector<8x32xf32>, vector<8x32xf32>, vector<8x32xf32>, vector<8x32xf32> -> vector<64x32xf32>
    %c0_28 = arith.constant 0 : index
    %c0_29 = arith.constant 0 : index
    %178 = vector.load %arg4[%c0_28, %c0_29] : memref<32x128xbf16, #tpu.memory_space<vmem>>, vector<32x128xbf16>
    %c0_30 = arith.constant 0 : index
    %c0_31 = arith.constant 0 : index
    %179 = vector.load %arg5[%c0_30, %c0_31] : memref<32x128xbf16, #tpu.memory_space<vmem>>, vector<32x128xbf16>
    %c0_32 = arith.constant 0 : index
    %c0_33 = arith.constant 0 : index
    %180 = vector.load %arg6[%c0_32, %c0_33] : memref<1x128xf32, #tpu.memory_space<vmem>>, vector<1x128xf32>
    %181 = arith.truncf %177 : vector<64x32xf32> to vector<64x32xbf16>
    %cst_34 = arith.constant dense<0.000000e+00> : vector<64x128xf32>
    %182 = tpu.matmul %181, %178, %cst_34 {dimension_numbers = #tpu.dot_dimension_numbers<[1], [0], [0], [1], [0, 0, 1, 1], [], []>} : vector<64x32xbf16>, vector<32x128xbf16>, vector<64x128xf32> -> vector<64x128xf32>
    %183 = vector.broadcast %180 : vector<1x128xf32> to vector<64x128xf32>
    %184 = arith.addf %182, %183 : vector<64x128xf32>
    %cst_35 = arith.constant 0.000000e+00 : f32
    %185 = vector.broadcast %cst_35 : f32 to vector<8x32xf32>
    %cst_36 = arith.constant 0.000000e+00 : f32
    %186 = vector.broadcast %cst_36 : f32 to vector<8x32xf32>
    %187 = vector.extract_strided_slice %184 {offsets = [0, 0], sizes = [8, 128], strides = [1, 1]} : vector<64x128xf32> to vector<8x128xf32>
    %188 = arith.truncf %185 : vector<8x32xf32> to vector<8x32xbf16>
    %cst_37 = arith.constant dense<0.000000e+00> : vector<8x128xf32>
    %189 = tpu.matmul %188, %179, %cst_37 {dimension_numbers = #tpu.dot_dimension_numbers<[1], [0], [0], [1], [0, 0, 1, 1], [], []>} : vector<8x32xbf16>, vector<32x128xbf16>, vector<8x128xf32> -> vector<8x128xf32>
    %190 = arith.addf %187, %189 : vector<8x128xf32>
    %191 = arith.negf %190 : vector<8x128xf32>
    %192 = math.exp %191 : vector<8x128xf32>
    %cst_38 = arith.constant 1.000000e+00 : f32
    %193 = vector.broadcast %cst_38 : f32 to vector<8x128xf32>
    %194 = arith.addf %193, %192 : vector<8x128xf32>
    %195 = arith.divf %193, %194 : vector<8x128xf32>
    %196 = math.tanh %190 : vector<8x128xf32>
    %197 = arith.select %5, %196, %195 : vector<8x128xi1>, vector<8x128xf32>
    %198 = vector.extract_strided_slice %197 {offsets = [0, 0], sizes = [8, 32], strides = [1, 1]} : vector<8x128xf32> to vector<8x32xf32>
    %199 = vector.extract_strided_slice %197 {offsets = [0, 32], sizes = [8, 32], strides = [1, 1]} : vector<8x128xf32> to vector<8x32xf32>
    %200 = vector.extract_strided_slice %197 {offsets = [0, 64], sizes = [8, 32], strides = [1, 1]} : vector<8x128xf32> to vector<8x32xf32>
    %201 = vector.extract_strided_slice %197 {offsets = [0, 96], sizes = [8, 32], strides = [1, 1]} : vector<8x128xf32> to vector<8x32xf32>
    %202 = arith.mulf %199, %186 : vector<8x32xf32>
    %203 = arith.mulf %198, %200 : vector<8x32xf32>
    %204 = arith.addf %202, %203 : vector<8x32xf32>
    %205 = math.tanh %204 : vector<8x32xf32>
    %206 = arith.mulf %201, %205 : vector<8x32xf32>
    %207 = arith.truncf %206 : vector<8x32xf32> to vector<8x32xbf16>
    %208 = vector.extract_strided_slice %6 {offsets = [0, 0], sizes = [32, 16], strides = [1, 1]} : vector<256x16xbf16> to vector<32x16xbf16>
    %cst_39 = arith.constant dense<0.000000e+00> : vector<8x16xf32>
    %209 = tpu.matmul %207, %208, %cst_39 {dimension_numbers = #tpu.dot_dimension_numbers<[1], [0], [0], [1], [0, 0, 1, 1], [], []>} : vector<8x32xbf16>, vector<32x16xbf16>, vector<8x16xf32> -> vector<8x16xf32>
    %210 = arith.addf %7, %209 : vector<8x16xf32>
    %211 = vector.extract_strided_slice %184 {offsets = [8, 0], sizes = [8, 128], strides = [1, 1]} : vector<64x128xf32> to vector<8x128xf32>
    %212 = arith.truncf %206 : vector<8x32xf32> to vector<8x32xbf16>
    %cst_40 = arith.constant dense<0.000000e+00> : vector<8x128xf32>
    %213 = tpu.matmul %212, %179, %cst_40 {dimension_numbers = #tpu.dot_dimension_numbers<[1], [0], [0], [1], [0, 0, 1, 1], [], []>} : vector<8x32xbf16>, vector<32x128xbf16>, vector<8x128xf32> -> vector<8x128xf32>
    %214 = arith.addf %211, %213 : vector<8x128xf32>
    %215 = arith.negf %214 : vector<8x128xf32>
    %216 = math.exp %215 : vector<8x128xf32>
    %cst_41 = arith.constant 1.000000e+00 : f32
    %217 = vector.broadcast %cst_41 : f32 to vector<8x128xf32>
    %218 = arith.addf %217, %216 : vector<8x128xf32>
    %219 = arith.divf %217, %218 : vector<8x128xf32>
    %220 = math.tanh %214 : vector<8x128xf32>
    %221 = arith.select %5, %220, %219 : vector<8x128xi1>, vector<8x128xf32>
    %222 = vector.extract_strided_slice %221 {offsets = [0, 0], sizes = [8, 32], strides = [1, 1]} : vector<8x128xf32> to vector<8x32xf32>
    %223 = vector.extract_strided_slice %221 {offsets = [0, 32], sizes = [8, 32], strides = [1, 1]} : vector<8x128xf32> to vector<8x32xf32>
    %224 = vector.extract_strided_slice %221 {offsets = [0, 64], sizes = [8, 32], strides = [1, 1]} : vector<8x128xf32> to vector<8x32xf32>
    %225 = vector.extract_strided_slice %221 {offsets = [0, 96], sizes = [8, 32], strides = [1, 1]} : vector<8x128xf32> to vector<8x32xf32>
    %226 = arith.mulf %223, %204 : vector<8x32xf32>
    %227 = arith.mulf %222, %224 : vector<8x32xf32>
    %228 = arith.addf %226, %227 : vector<8x32xf32>
    %229 = math.tanh %228 : vector<8x32xf32>
    %230 = arith.mulf %225, %229 : vector<8x32xf32>
    %231 = arith.truncf %230 : vector<8x32xf32> to vector<8x32xbf16>
    %232 = vector.extract_strided_slice %6 {offsets = [32, 0], sizes = [32, 16], strides = [1, 1]} : vector<256x16xbf16> to vector<32x16xbf16>
    %cst_42 = arith.constant dense<0.000000e+00> : vector<8x16xf32>
    %233 = tpu.matmul %231, %232, %cst_42 {dimension_numbers = #tpu.dot_dimension_numbers<[1], [0], [0], [1], [0, 0, 1, 1], [], []>} : vector<8x32xbf16>, vector<32x16xbf16>, vector<8x16xf32> -> vector<8x16xf32>
    %234 = arith.addf %210, %233 : vector<8x16xf32>
    %235 = vector.extract_strided_slice %184 {offsets = [16, 0], sizes = [8, 128], strides = [1, 1]} : vector<64x128xf32> to vector<8x128xf32>
    %236 = arith.truncf %230 : vector<8x32xf32> to vector<8x32xbf16>
    %cst_43 = arith.constant dense<0.000000e+00> : vector<8x128xf32>
    %237 = tpu.matmul %236, %179, %cst_43 {dimension_numbers = #tpu.dot_dimension_numbers<[1], [0], [0], [1], [0, 0, 1, 1], [], []>} : vector<8x32xbf16>, vector<32x128xbf16>, vector<8x128xf32> -> vector<8x128xf32>
    %238 = arith.addf %235, %237 : vector<8x128xf32>
    %239 = arith.negf %238 : vector<8x128xf32>
    %240 = math.exp %239 : vector<8x128xf32>
    %cst_44 = arith.constant 1.000000e+00 : f32
    %241 = vector.broadcast %cst_44 : f32 to vector<8x128xf32>
    %242 = arith.addf %241, %240 : vector<8x128xf32>
    %243 = arith.divf %241, %242 : vector<8x128xf32>
    %244 = math.tanh %238 : vector<8x128xf32>
    %245 = arith.select %5, %244, %243 : vector<8x128xi1>, vector<8x128xf32>
    %246 = vector.extract_strided_slice %245 {offsets = [0, 0], sizes = [8, 32], strides = [1, 1]} : vector<8x128xf32> to vector<8x32xf32>
    %247 = vector.extract_strided_slice %245 {offsets = [0, 32], sizes = [8, 32], strides = [1, 1]} : vector<8x128xf32> to vector<8x32xf32>
    %248 = vector.extract_strided_slice %245 {offsets = [0, 64], sizes = [8, 32], strides = [1, 1]} : vector<8x128xf32> to vector<8x32xf32>
    %249 = vector.extract_strided_slice %245 {offsets = [0, 96], sizes = [8, 32], strides = [1, 1]} : vector<8x128xf32> to vector<8x32xf32>
    %250 = arith.mulf %247, %228 : vector<8x32xf32>
    %251 = arith.mulf %246, %248 : vector<8x32xf32>
    %252 = arith.addf %250, %251 : vector<8x32xf32>
    %253 = math.tanh %252 : vector<8x32xf32>
    %254 = arith.mulf %249, %253 : vector<8x32xf32>
    %255 = arith.truncf %254 : vector<8x32xf32> to vector<8x32xbf16>
    %256 = vector.extract_strided_slice %6 {offsets = [64, 0], sizes = [32, 16], strides = [1, 1]} : vector<256x16xbf16> to vector<32x16xbf16>
    %cst_45 = arith.constant dense<0.000000e+00> : vector<8x16xf32>
    %257 = tpu.matmul %255, %256, %cst_45 {dimension_numbers = #tpu.dot_dimension_numbers<[1], [0], [0], [1], [0, 0, 1, 1], [], []>} : vector<8x32xbf16>, vector<32x16xbf16>, vector<8x16xf32> -> vector<8x16xf32>
    %258 = arith.addf %234, %257 : vector<8x16xf32>
    %259 = vector.extract_strided_slice %184 {offsets = [24, 0], sizes = [8, 128], strides = [1, 1]} : vector<64x128xf32> to vector<8x128xf32>
    %260 = arith.truncf %254 : vector<8x32xf32> to vector<8x32xbf16>
    %cst_46 = arith.constant dense<0.000000e+00> : vector<8x128xf32>
    %261 = tpu.matmul %260, %179, %cst_46 {dimension_numbers = #tpu.dot_dimension_numbers<[1], [0], [0], [1], [0, 0, 1, 1], [], []>} : vector<8x32xbf16>, vector<32x128xbf16>, vector<8x128xf32> -> vector<8x128xf32>
    %262 = arith.addf %259, %261 : vector<8x128xf32>
    %263 = arith.negf %262 : vector<8x128xf32>
    %264 = math.exp %263 : vector<8x128xf32>
    %cst_47 = arith.constant 1.000000e+00 : f32
    %265 = vector.broadcast %cst_47 : f32 to vector<8x128xf32>
    %266 = arith.addf %265, %264 : vector<8x128xf32>
    %267 = arith.divf %265, %266 : vector<8x128xf32>
    %268 = math.tanh %262 : vector<8x128xf32>
    %269 = arith.select %5, %268, %267 : vector<8x128xi1>, vector<8x128xf32>
    %270 = vector.extract_strided_slice %269 {offsets = [0, 0], sizes = [8, 32], strides = [1, 1]} : vector<8x128xf32> to vector<8x32xf32>
    %271 = vector.extract_strided_slice %269 {offsets = [0, 32], sizes = [8, 32], strides = [1, 1]} : vector<8x128xf32> to vector<8x32xf32>
    %272 = vector.extract_strided_slice %269 {offsets = [0, 64], sizes = [8, 32], strides = [1, 1]} : vector<8x128xf32> to vector<8x32xf32>
    %273 = vector.extract_strided_slice %269 {offsets = [0, 96], sizes = [8, 32], strides = [1, 1]} : vector<8x128xf32> to vector<8x32xf32>
    %274 = arith.mulf %271, %252 : vector<8x32xf32>
    %275 = arith.mulf %270, %272 : vector<8x32xf32>
    %276 = arith.addf %274, %275 : vector<8x32xf32>
    %277 = math.tanh %276 : vector<8x32xf32>
    %278 = arith.mulf %273, %277 : vector<8x32xf32>
    %279 = arith.truncf %278 : vector<8x32xf32> to vector<8x32xbf16>
    %280 = vector.extract_strided_slice %6 {offsets = [96, 0], sizes = [32, 16], strides = [1, 1]} : vector<256x16xbf16> to vector<32x16xbf16>
    %cst_48 = arith.constant dense<0.000000e+00> : vector<8x16xf32>
    %281 = tpu.matmul %279, %280, %cst_48 {dimension_numbers = #tpu.dot_dimension_numbers<[1], [0], [0], [1], [0, 0, 1, 1], [], []>} : vector<8x32xbf16>, vector<32x16xbf16>, vector<8x16xf32> -> vector<8x16xf32>
    %282 = arith.addf %258, %281 : vector<8x16xf32>
    %283 = vector.extract_strided_slice %184 {offsets = [32, 0], sizes = [8, 128], strides = [1, 1]} : vector<64x128xf32> to vector<8x128xf32>
    %284 = arith.truncf %278 : vector<8x32xf32> to vector<8x32xbf16>
    %cst_49 = arith.constant dense<0.000000e+00> : vector<8x128xf32>
    %285 = tpu.matmul %284, %179, %cst_49 {dimension_numbers = #tpu.dot_dimension_numbers<[1], [0], [0], [1], [0, 0, 1, 1], [], []>} : vector<8x32xbf16>, vector<32x128xbf16>, vector<8x128xf32> -> vector<8x128xf32>
    %286 = arith.addf %283, %285 : vector<8x128xf32>
    %287 = arith.negf %286 : vector<8x128xf32>
    %288 = math.exp %287 : vector<8x128xf32>
    %cst_50 = arith.constant 1.000000e+00 : f32
    %289 = vector.broadcast %cst_50 : f32 to vector<8x128xf32>
    %290 = arith.addf %289, %288 : vector<8x128xf32>
    %291 = arith.divf %289, %290 : vector<8x128xf32>
    %292 = math.tanh %286 : vector<8x128xf32>
    %293 = arith.select %5, %292, %291 : vector<8x128xi1>, vector<8x128xf32>
    %294 = vector.extract_strided_slice %293 {offsets = [0, 0], sizes = [8, 32], strides = [1, 1]} : vector<8x128xf32> to vector<8x32xf32>
    %295 = vector.extract_strided_slice %293 {offsets = [0, 32], sizes = [8, 32], strides = [1, 1]} : vector<8x128xf32> to vector<8x32xf32>
    %296 = vector.extract_strided_slice %293 {offsets = [0, 64], sizes = [8, 32], strides = [1, 1]} : vector<8x128xf32> to vector<8x32xf32>
    %297 = vector.extract_strided_slice %293 {offsets = [0, 96], sizes = [8, 32], strides = [1, 1]} : vector<8x128xf32> to vector<8x32xf32>
    %298 = arith.mulf %295, %276 : vector<8x32xf32>
    %299 = arith.mulf %294, %296 : vector<8x32xf32>
    %300 = arith.addf %298, %299 : vector<8x32xf32>
    %301 = math.tanh %300 : vector<8x32xf32>
    %302 = arith.mulf %297, %301 : vector<8x32xf32>
    %303 = arith.truncf %302 : vector<8x32xf32> to vector<8x32xbf16>
    %304 = vector.extract_strided_slice %6 {offsets = [128, 0], sizes = [32, 16], strides = [1, 1]} : vector<256x16xbf16> to vector<32x16xbf16>
    %cst_51 = arith.constant dense<0.000000e+00> : vector<8x16xf32>
    %305 = tpu.matmul %303, %304, %cst_51 {dimension_numbers = #tpu.dot_dimension_numbers<[1], [0], [0], [1], [0, 0, 1, 1], [], []>} : vector<8x32xbf16>, vector<32x16xbf16>, vector<8x16xf32> -> vector<8x16xf32>
    %306 = arith.addf %282, %305 : vector<8x16xf32>
    %307 = vector.extract_strided_slice %184 {offsets = [40, 0], sizes = [8, 128], strides = [1, 1]} : vector<64x128xf32> to vector<8x128xf32>
    %308 = arith.truncf %302 : vector<8x32xf32> to vector<8x32xbf16>
    %cst_52 = arith.constant dense<0.000000e+00> : vector<8x128xf32>
    %309 = tpu.matmul %308, %179, %cst_52 {dimension_numbers = #tpu.dot_dimension_numbers<[1], [0], [0], [1], [0, 0, 1, 1], [], []>} : vector<8x32xbf16>, vector<32x128xbf16>, vector<8x128xf32> -> vector<8x128xf32>
    %310 = arith.addf %307, %309 : vector<8x128xf32>
    %311 = arith.negf %310 : vector<8x128xf32>
    %312 = math.exp %311 : vector<8x128xf32>
    %cst_53 = arith.constant 1.000000e+00 : f32
    %313 = vector.broadcast %cst_53 : f32 to vector<8x128xf32>
    %314 = arith.addf %313, %312 : vector<8x128xf32>
    %315 = arith.divf %313, %314 : vector<8x128xf32>
    %316 = math.tanh %310 : vector<8x128xf32>
    %317 = arith.select %5, %316, %315 : vector<8x128xi1>, vector<8x128xf32>
    %318 = vector.extract_strided_slice %317 {offsets = [0, 0], sizes = [8, 32], strides = [1, 1]} : vector<8x128xf32> to vector<8x32xf32>
    %319 = vector.extract_strided_slice %317 {offsets = [0, 32], sizes = [8, 32], strides = [1, 1]} : vector<8x128xf32> to vector<8x32xf32>
    %320 = vector.extract_strided_slice %317 {offsets = [0, 64], sizes = [8, 32], strides = [1, 1]} : vector<8x128xf32> to vector<8x32xf32>
    %321 = vector.extract_strided_slice %317 {offsets = [0, 96], sizes = [8, 32], strides = [1, 1]} : vector<8x128xf32> to vector<8x32xf32>
    %322 = arith.mulf %319, %300 : vector<8x32xf32>
    %323 = arith.mulf %318, %320 : vector<8x32xf32>
    %324 = arith.addf %322, %323 : vector<8x32xf32>
    %325 = math.tanh %324 : vector<8x32xf32>
    %326 = arith.mulf %321, %325 : vector<8x32xf32>
    %327 = arith.truncf %326 : vector<8x32xf32> to vector<8x32xbf16>
    %328 = vector.extract_strided_slice %6 {offsets = [160, 0], sizes = [32, 16], strides = [1, 1]} : vector<256x16xbf16> to vector<32x16xbf16>
    %cst_54 = arith.constant dense<0.000000e+00> : vector<8x16xf32>
    %329 = tpu.matmul %327, %328, %cst_54 {dimension_numbers = #tpu.dot_dimension_numbers<[1], [0], [0], [1], [0, 0, 1, 1], [], []>} : vector<8x32xbf16>, vector<32x16xbf16>, vector<8x16xf32> -> vector<8x16xf32>
    %330 = arith.addf %306, %329 : vector<8x16xf32>
    %331 = vector.extract_strided_slice %184 {offsets = [48, 0], sizes = [8, 128], strides = [1, 1]} : vector<64x128xf32> to vector<8x128xf32>
    %332 = arith.truncf %326 : vector<8x32xf32> to vector<8x32xbf16>
    %cst_55 = arith.constant dense<0.000000e+00> : vector<8x128xf32>
    %333 = tpu.matmul %332, %179, %cst_55 {dimension_numbers = #tpu.dot_dimension_numbers<[1], [0], [0], [1], [0, 0, 1, 1], [], []>} : vector<8x32xbf16>, vector<32x128xbf16>, vector<8x128xf32> -> vector<8x128xf32>
    %334 = arith.addf %331, %333 : vector<8x128xf32>
    %335 = arith.negf %334 : vector<8x128xf32>
    %336 = math.exp %335 : vector<8x128xf32>
    %cst_56 = arith.constant 1.000000e+00 : f32
    %337 = vector.broadcast %cst_56 : f32 to vector<8x128xf32>
    %338 = arith.addf %337, %336 : vector<8x128xf32>
    %339 = arith.divf %337, %338 : vector<8x128xf32>
    %340 = math.tanh %334 : vector<8x128xf32>
    %341 = arith.select %5, %340, %339 : vector<8x128xi1>, vector<8x128xf32>
    %342 = vector.extract_strided_slice %341 {offsets = [0, 0], sizes = [8, 32], strides = [1, 1]} : vector<8x128xf32> to vector<8x32xf32>
    %343 = vector.extract_strided_slice %341 {offsets = [0, 32], sizes = [8, 32], strides = [1, 1]} : vector<8x128xf32> to vector<8x32xf32>
    %344 = vector.extract_strided_slice %341 {offsets = [0, 64], sizes = [8, 32], strides = [1, 1]} : vector<8x128xf32> to vector<8x32xf32>
    %345 = vector.extract_strided_slice %341 {offsets = [0, 96], sizes = [8, 32], strides = [1, 1]} : vector<8x128xf32> to vector<8x32xf32>
    %346 = arith.mulf %343, %324 : vector<8x32xf32>
    %347 = arith.mulf %342, %344 : vector<8x32xf32>
    %348 = arith.addf %346, %347 : vector<8x32xf32>
    %349 = math.tanh %348 : vector<8x32xf32>
    %350 = arith.mulf %345, %349 : vector<8x32xf32>
    %351 = arith.truncf %350 : vector<8x32xf32> to vector<8x32xbf16>
    %352 = vector.extract_strided_slice %6 {offsets = [192, 0], sizes = [32, 16], strides = [1, 1]} : vector<256x16xbf16> to vector<32x16xbf16>
    %cst_57 = arith.constant dense<0.000000e+00> : vector<8x16xf32>
    %353 = tpu.matmul %351, %352, %cst_57 {dimension_numbers = #tpu.dot_dimension_numbers<[1], [0], [0], [1], [0, 0, 1, 1], [], []>} : vector<8x32xbf16>, vector<32x16xbf16>, vector<8x16xf32> -> vector<8x16xf32>
    %354 = arith.addf %330, %353 : vector<8x16xf32>
    %355 = vector.extract_strided_slice %184 {offsets = [56, 0], sizes = [8, 128], strides = [1, 1]} : vector<64x128xf32> to vector<8x128xf32>
    %356 = arith.truncf %350 : vector<8x32xf32> to vector<8x32xbf16>
    %cst_58 = arith.constant dense<0.000000e+00> : vector<8x128xf32>
    %357 = tpu.matmul %356, %179, %cst_58 {dimension_numbers = #tpu.dot_dimension_numbers<[1], [0], [0], [1], [0, 0, 1, 1], [], []>} : vector<8x32xbf16>, vector<32x128xbf16>, vector<8x128xf32> -> vector<8x128xf32>
    %358 = arith.addf %355, %357 : vector<8x128xf32>
    %359 = arith.negf %358 : vector<8x128xf32>
    %360 = math.exp %359 : vector<8x128xf32>
    %cst_59 = arith.constant 1.000000e+00 : f32
    %361 = vector.broadcast %cst_59 : f32 to vector<8x128xf32>
    %362 = arith.addf %361, %360 : vector<8x128xf32>
    %363 = arith.divf %361, %362 : vector<8x128xf32>
    %364 = math.tanh %358 : vector<8x128xf32>
    %365 = arith.select %5, %364, %363 : vector<8x128xi1>, vector<8x128xf32>
    %366 = vector.extract_strided_slice %365 {offsets = [0, 0], sizes = [8, 32], strides = [1, 1]} : vector<8x128xf32> to vector<8x32xf32>
    %367 = vector.extract_strided_slice %365 {offsets = [0, 32], sizes = [8, 32], strides = [1, 1]} : vector<8x128xf32> to vector<8x32xf32>
    %368 = vector.extract_strided_slice %365 {offsets = [0, 64], sizes = [8, 32], strides = [1, 1]} : vector<8x128xf32> to vector<8x32xf32>
    %369 = vector.extract_strided_slice %365 {offsets = [0, 96], sizes = [8, 32], strides = [1, 1]} : vector<8x128xf32> to vector<8x32xf32>
    %370 = arith.mulf %367, %348 : vector<8x32xf32>
    %371 = arith.mulf %366, %368 : vector<8x32xf32>
    %372 = arith.addf %370, %371 : vector<8x32xf32>
    %373 = math.tanh %372 : vector<8x32xf32>
    %374 = arith.mulf %369, %373 : vector<8x32xf32>
    %375 = arith.truncf %374 : vector<8x32xf32> to vector<8x32xbf16>
    %376 = vector.extract_strided_slice %6 {offsets = [224, 0], sizes = [32, 16], strides = [1, 1]} : vector<256x16xbf16> to vector<32x16xbf16>
    %cst_60 = arith.constant dense<0.000000e+00> : vector<8x16xf32>
    %377 = tpu.matmul %375, %376, %cst_60 {dimension_numbers = #tpu.dot_dimension_numbers<[1], [0], [0], [1], [0, 0, 1, 1], [], []>} : vector<8x32xbf16>, vector<32x16xbf16>, vector<8x16xf32> -> vector<8x16xf32>
    %378 = arith.addf %354, %377 : vector<8x16xf32>
    %c0_61 = arith.constant 0 : index
    %c0_62 = arith.constant 0 : index
    %379 = vector.load %arg8[%c0_61, %c0_62] : memref<1x16xf32, #tpu.memory_space<vmem>>, vector<1x16xf32>
    %380 = vector.broadcast %379 : vector<1x16xf32> to vector<8x16xf32>
    %381 = arith.addf %378, %380 : vector<8x16xf32>
    %c0_63 = arith.constant 0 : index
    %c0_64 = arith.constant 0 : index
    %382 = vector.load %arg9[%c0_63, %c0_64] : memref<8x16xf32, #tpu.memory_space<vmem>>, vector<8x16xf32>
    tpu.vector_store %arg9[%c0_63, %c0_64], %381 {strides = array<i32>} : memref<8x16xf32, #tpu.memory_space<vmem>>, vector<8x16xf32>,
    return
  }
}

</mosaic_0001>

<llo_original>
// kernel: tpu_custom_call.1
$region0: #{tpu_custom_call.1}
  #allocation0 [shape = 'u32[]', space=smem, size = 0x4, offset = 0x4, fixed_abs, tag = 'smem constant byte address 0x4 - core index']
  #allocation1 [shape = 'u32[144,128]{1,0:T(1,128)}', space=vmem, size = 0x12000, scoped, tag = 'internal scratch']
  %s0 = inlined_call_operand.vmem [shape: bf16[64,16], index: 0, kind: input, shape index: {}]
  %s1 = inlined_call_operand.vmem [shape: bf16[16,128], index: 1, kind: input, shape index: {}]
  %s2 = inlined_call_operand.vmem [shape: bf16[32,128], index: 2, kind: input, shape index: {}]
  %s3 = inlined_call_operand.vmem [shape: f32[1,128], index: 3, kind: input, shape index: {}]
  %s4 = inlined_call_operand.vmem [shape: bf16[32,128], index: 4, kind: input, shape index: {}]
  %s5 = inlined_call_operand.vmem [shape: bf16[32,128], index: 5, kind: input, shape index: {}]
  %s6 = inlined_call_operand.vmem [shape: f32[1,128], index: 6, kind: input, shape index: {}]
  %s7 = inlined_call_operand.vmem [shape: bf16[256,16], index: 7, kind: input, shape index: {}]
  %s8 = inlined_call_operand.vmem [shape: f32[1,16], index: 8, kind: input, shape index: {}]
  %s9 = inlined_call_operand.hbm [shape: f32[8,16], index: 9, kind: output, shape index: {}]
  %s10 = sld [smem:[#allocation0]]
  $region46: #{tpu_custom_call.1} parent=0
    _
  %s12 = ssub.s32 1, %s10
  %s13 = scalar_select 0, %s12, %s10
  $region1: #{tpu_custom_call.1} parent=0
    #allocation2 [shape = 'u8[4096]{0}', space=vmem, size = 0x1000, scoped, tag = 'output window, operand 0, single buffered']
    #allocation3 [shape = 's32[1]{0}', space=sflag, size = 0x4, scoped, tag = 'scoped memory for tpu_custom_call.1']
    %14 = vsyncpa [#allocation3], 0
    // Predicated region
    $region2: #{tpu_custom_call.1} parent=1 // pred_check
      _
    $region3: #{tpu_custom_call.1} parent=1 // pred_check_branch
      %16 = sbr.rel (0) target = $region5
    $region4: #{tpu_custom_call.1} parent=1 // pred_region
      _
    $region5: #{tpu_custom_call.1} parent=1 // pred_fallthru
      _
    // Predicated region
    $region6: #{tpu_custom_call.1} parent=1 // pred_check
      _
    $region7: #{tpu_custom_call.1} parent=1 // pred_check_branch
      %18 = sbr.rel (0) target = $region9
    $region8: #{tpu_custom_call.1} parent=1 // pred_region
      _
    $region9: #{tpu_custom_call.1} parent=1 // pred_fallthru
      _
    // Predicated region
    $region10: #{tpu_custom_call.1} parent=1 // pred_check
      _
    $region11: #{tpu_custom_call.1} parent=1 // pred_check_branch
      %20 = sbr.rel (0) target = $region13
    $region12: #{tpu_custom_call.1} parent=1 // pred_region
      _
    $region13: #{tpu_custom_call.1} parent=1 // pred_fallthru
      _
    // Predicated region
    $region14: #{tpu_custom_call.1} parent=1 // pred_check
      _
    $region15: #{tpu_custom_call.1} parent=1 // pred_check_branch
      %22 = sbr.rel (0) target = $region17
    $region16: #{tpu_custom_call.1} parent=1 // pred_region
      _
    $region17: #{tpu_custom_call.1} parent=1 // pred_fallthru
      _
    // Predicated region
    $region18: #{tpu_custom_call.1} parent=1 // pred_check
      _
    $region19: #{tpu_custom_call.1} parent=1 // pred_check_branch
      %24 = sbr.rel (0) target = $region21
    $region20: #{tpu_custom_call.1} parent=1 // pred_region
      _
    $region21: #{tpu_custom_call.1} parent=1 // pred_fallthru
      _
    // Predicated region
    $region22: #{tpu_custom_call.1} parent=1 // pred_check
      _
    $region23: #{tpu_custom_call.1} parent=1 // pred_check_branch
      %26 = sbr.rel (0) target = $region25
    $region24: #{tpu_custom_call.1} parent=1 // pred_region
      _
    $region25: #{tpu_custom_call.1} parent=1 // pred_fallthru
      _
    // Predicated region
    $region26: #{tpu_custom_call.1} parent=1 // pred_check
      _
    $region27: #{tpu_custom_call.1} parent=1 // pred_check_branch
      %28 = sbr.rel (0) target = $region29
    $region28: #{tpu_custom_call.1} parent=1 // pred_region
      _
    $region29: #{tpu_custom_call.1} parent=1 // pred_fallthru
      _
    // Predicated region
    $region30: #{tpu_custom_call.1} parent=1 // pred_check
      _
    $region31: #{tpu_custom_call.1} parent=1 // pred_check_branch
      %30 = sbr.rel (0) target = $region33
    $region32: #{tpu_custom_call.1} parent=1 // pred_region
      _
    $region33: #{tpu_custom_call.1} parent=1 // pred_fallthru
      _
    // Predicated region
    $region34: #{tpu_custom_call.1} parent=1 // pred_check
      _
    $region35: #{tpu_custom_call.1} parent=1 // pred_check_branch
      %32 = sbr.rel (0) target = $region37
    $region36: #{tpu_custom_call.1} parent=1 // pred_region
      _
    $region37: #{tpu_custom_call.1} parent=1 // pred_fallthru
      _
    %v34 = vlaneseq
    %v35 = vand.u32 %v34, 127
    %vm36 = vcmp.ge.s32.totalorder %v35, 64
    %vm37 = vcmp.lt.s32.totalorder %v35, 96
    %vm38 = vmand %vm36, %vm37
    %v39 = vld [vmem:[%s7] sm:$0xf]
    %v40 = vld [vmem:[%s7 + $0x4] sm:$0xf]
    %v41 = vld [vmem:[%s7 + $0x8] sm:$0xf]
    %v42 = vld [vmem:[%s7 + $0xc] sm:$0xf]
    %v43 = vld [vmem:[%s7 + $0x10] sm:$0xf]
    %v44 = vld [vmem:[%s7 + $0x14] sm:$0xf]
    %v45 = vld [vmem:[%s7 + $0x18] sm:$0xf]
    %v46 = vld [vmem:[%s7 + $0x1c] sm:$0xf]
    %v47 = vld [vmem:[%s7 + $0x20] sm:$0xf]
    %v48 = vld [vmem:[%s7 + $0x24] sm:$0xf]
    %v49 = vld [vmem:[%s7 + $0x28] sm:$0xf]
    %v50 = vld [vmem:[%s7 + $0x2c] sm:$0xf]
    %v51 = vld [vmem:[%s7 + $0x30] sm:$0xf]
    %v52 = vld [vmem:[%s7 + $0x34] sm:$0xf]
    %v53 = vld [vmem:[%s7 + $0x38] sm:$0xf]
    %v54 = vld [vmem:[%s7 + $0x3c] sm:$0xf]
    %v55 = vld [vmem:[%s7 + $0x40] sm:$0xf]
    %v56 = vld [vmem:[%s7 + $0x44] sm:$0xf]
    %v57 = vld [vmem:[%s7 + $0x48] sm:$0xf]
    %v58 = vld [vmem:[%s7 + $0x4c] sm:$0xf]
    %v59 = vld [vmem:[%s7 + $0x50] sm:$0xf]
    %v60 = vld [vmem:[%s7 + $0x54] sm:$0xf]
    %v61 = vld [vmem:[%s7 + $0x58] sm:$0xf]
    %v62 = vld [vmem:[%s7 + $0x5c] sm:$0xf]
    %v63 = vld [vmem:[%s7 + $0x60] sm:$0xf]
    %v64 = vld [vmem:[%s7 + $0x64] sm:$0xf]
    %v65 = vld [vmem:[%s7 + $0x68] sm:$0xf]
    %v66 = vld [vmem:[%s7 + $0x6c] sm:$0xf]
    %v67 = vld [vmem:[%s7 + $0x70] sm:$0xf]
    %v68 = vld [vmem:[%s7 + $0x74] sm:$0xf]
    %v69 = vld [vmem:[%s7 + $0x78] sm:$0xf]
    %v70 = vld [vmem:[%s7 + $0x7c] sm:$0xf]
    %v71 = vld [vmem:[%s0] sm:$0xf]
    %v72 = vld [vmem:[%s0 + $0x4] sm:$0xf]
    %v73 = vld [vmem:[%s0 + $0x8] sm:$0xf]
    %v74 = vld [vmem:[%s0 + $0xc] sm:$0xf]
    %v75 = vld [vmem:[%s0 + $0x10] sm:$0xf]
    %v76 = vld [vmem:[%s0 + $0x14] sm:$0xf]
    %v77 = vld [vmem:[%s0 + $0x18] sm:$0xf]
    %v78 = vld [vmem:[%s0 + $0x1c] sm:$0xf]
    %v79 = vld [vmem:[%s1] sm:$0xf]
    %v80 = vld [vmem:[%s1 + $0x4] sm:$0xf]
    %v81 = vld [vmem:[%s2] sm:$0xf]
    %v82 = vld [vmem:[%s2 + $0x4] sm:$0xf]
    %v83 = vld [vmem:[%s2 + $0x8] sm:$0xf]
    %v84 = vld [vmem:[%s2 + $0xc] sm:$0xf]
    %v85 = vld [vmem:[%s3] sm:$0x1]
    %v87 = vlaneseq
    %v88 = vshrl.u32 %v87, 7
    %v89 = vsub.s32 0, %v88
    %v90 = vrot.slane %v85, %v89
    %v100 = vunpack.c.l.b16 %v71
    %v101 = vunpack.c.l.b16 %v72
    %v102 = vunpack.c.l.b16 %v73
    %v103 = vunpack.c.l.b16 %v74
    %v104 = vunpack.c.l.b16 %v75
    %v105 = vunpack.c.l.b16 %v76
    %v106 = vunpack.c.l.b16 %v77
    %v107 = vunpack.c.l.b16 %v78
    %v108 = vpack.c.b16 %v101, %v100
    %v109 = vpack.c.b16 %v103, %v102
    %v110 = vpack.c.b16 %v105, %v104
    %v111 = vpack.c.b16 %v107, %v106
    %v114 = vunpack.c.l.b16 %v79
    %v115 = vunpack.c.l.b16 %v80
    %v116 = vpack.c.b16 %v115, %v114
    %vm118 = vcmask 130048
    %v120 = vsel %vm118, %v108, 0
    %v123 = vsel %vm118, %v109, 0
    %v126 = vsel %vm118, %v110, 0
    %v129 = vsel %vm118, %v111, 0
    %131 = vmatprep.subr.bf16.mxu0 0
    %132 = vmatpush1.bf16.msra.mxu0 %v116
    %133 = vmatprep.subr.bf16.mxu0 0
    %134 = vmatpush1.bf16.msra.mxu0 0
    %135 = vmatprep.subr.bf16.mxu0 0
    %136 = vmatpush1.bf16.msra.mxu0 0
    %137 = vmatprep.subr.bf16.mxu0 0
    %138 = vmatpush1.bf16.msra.mxu0 0
    %139 = vmatprep.subr.bf16.mxu0 0
    %140 = vmatpush1.bf16.msra.mxu0 0
    %141 = vmatprep.subr.bf16.mxu0 0
    %142 = vmatpush1.bf16.msra.mxu0 0
    %143 = vmatprep.subr.bf16.mxu0 0
    %144 = vmatpush1.bf16.msra.mxu0 0
    %145 = vmatprep.subr.bf16.mxu0 0
    %146 = vmatpush1.bf16.msra.mxu0 0
    %147 = vmatprep.subr.bf16.mxu0 0
    %148 = vmatpush1.bf16.msra.mxu0 0
    %149 = vmatprep.subr.bf16.mxu0 0
    %150 = vmatpush1.bf16.msra.mxu0 0
    %151 = vmatprep.subr.bf16.mxu0 0
    %152 = vmatpush1.bf16.msra.mxu0 0
    %153 = vmatprep.subr.bf16.mxu0 0
    %154 = vmatpush1.bf16.msra.mxu0 0
    %155 = vmatprep.subr.bf16.mxu0 0
    %156 = vmatpush1.bf16.msra.mxu0 0
    %157 = vmatprep.subr.bf16.mxu0 0
    %158 = vmatpush1.bf16.msra.mxu0 0
    %159 = vmatprep.subr.bf16.mxu0 0
    %160 = vmatpush1.bf16.msra.mxu0 0
    %161 = vmatprep.subr.bf16.mxu0 0
    %162 = vmatpush1.bf16.msra.mxu0 0
    %163 = vmatprep.mubr.bf16.mxu0 0
    %164 = vmatmul.mubr.bf16.gmra.mrb[0].mxu0 %v120
    %v165 = vpop.f32.mrb[0].mxu0
    %v166 = vadd.f32 %v90, %v165
    %v167 = vpop.f32.mrb[0].mxu0
    %v168 = vpop.f32.mrb[0].mxu0
    %v169 = vadd.f32 %v90, %v168
    %v170 = vpop.f32.mrb[0].mxu0
    %171 = vmatprep.mubr.bf16.mxu0 0
    %172 = vmatmul.mubr.bf16.gmra.mrb[0].mxu0 %v123
    %v173 = vpop.f32.mrb[0].mxu0
    %v174 = vadd.f32 %v90, %v173
    %v175 = vpop.f32.mrb[0].mxu0
    %v176 = vpop.f32.mrb[0].mxu0
    %v177 = vadd.f32 %v90, %v176
    %v178 = vpop.f32.mrb[0].mxu0
    %179 = vmatprep.mubr.bf16.mxu0 0
    %180 = vmatmul.mubr.bf16.gmra.mrb[0].mxu0 %v126
    %v181 = vpop.f32.mrb[0].mxu0
    %v182 = vadd.f32 %v90, %v181
    %v183 = vpop.f32.mrb[0].mxu0
    %v184 = vpop.f32.mrb[0].mxu0
    %v185 = vadd.f32 %v90, %v184
    %v186 = vpop.f32.mrb[0].mxu0
    %187 = vmatprep.mubr.bf16.mxu0 0
    %188 = vmatmul.mubr.bf16.gmra.mrb[0].mxu0 %v129
    %v189 = vpop.f32.mrb[0].mxu0
    %v190 = vadd.f32 %v90, %v189
    %v191 = vpop.f32.mrb[0].mxu0
    %v192 = vpop.f32.mrb[0].mxu0
    %v193 = vadd.f32 %v90, %v192
    %v194 = vpop.f32.mrb[0].mxu0
    %195 = vdwg.mxu0
    %v200 = vunpack.c.l.b16 %v81
    %v201 = vunpack.c.l.b16 %v82
    %v202 = vunpack.c.l.b16 %v83
    %v203 = vunpack.c.l.b16 %v84
    %v204 = vpack.c.b16 %v201, %v200
    %v205 = vpack.c.b16 %v203, %v202
    %vm208 = vcmask 261120
    %v210 = vsel %vm208, 0, 0
    %212 = vmatprep.subr.bf16.mxu0 0
    %213 = vmatpush1.bf16.msra.mxu0 %v204
    %214 = vmatprep.subr.bf16.mxu0 0
    %215 = vmatpush1.bf16.msra.mxu0 %v205
    %216 = vmatprep.subr.bf16.mxu0 0
    %217 = vmatpush1.bf16.msra.mxu0 0
    %218 = vmatprep.subr.bf16.mxu0 0
    %219 = vmatpush1.bf16.msra.mxu0 0
    %220 = vmatprep.subr.bf16.mxu0 0
    %221 = vmatpush1.bf16.msra.mxu0 0
    %222 = vmatprep.subr.bf16.mxu0 0
    %223 = vmatpush1.bf16.msra.mxu0 0
    %224 = vmatprep.subr.bf16.mxu0 0
    %225 = vmatpush1.bf16.msra.mxu0 0
    %226 = vmatprep.subr.bf16.mxu0 0
    %227 = vmatpush1.bf16.msra.mxu0 0
    %228 = vmatprep.subr.bf16.mxu0 0
    %229 = vmatpush1.bf16.msra.mxu0 0
    %230 = vmatprep.subr.bf16.mxu0 0
    %231 = vmatpush1.bf16.msra.mxu0 0
    %232 = vmatprep.subr.bf16.mxu0 0
    %233 = vmatpush1.bf16.msra.mxu0 0
    %234 = vmatprep.subr.bf16.mxu0 0
    %235 = vmatpush1.bf16.msra.mxu0 0
    %236 = vmatprep.subr.bf16.mxu0 0
    %237 = vmatpush1.bf16.msra.mxu0 0
    %238 = vmatprep.subr.bf16.mxu0 0
    %239 = vmatpush1.bf16.msra.mxu0 0
    %240 = vmatprep.subr.bf16.mxu0 0
    %241 = vmatpush1.bf16.msra.mxu0 0
    %242 = vmatprep.subr.bf16.mxu0 0
    %243 = vmatpush1.bf16.msra.mxu0 0
    %244 = vmatprep.mubr.bf16.mxu0 0
    %245 = vmatmul.mubr.bf16.gmra.mrb[0].mxu0 %v210
    %v246 = vpop.f32.mrb[0].mxu0
    %v247 = vadd.f32 0.0, %v246
    %v248 = vpop.f32.mrb[0].mxu0
    %v249 = vpop.f32.mrb[0].mxu0
    %v250 = vpop.f32.mrb[0].mxu0
    %251 = vdwg.mxu0
    %v252 = vadd.f32 %v166, %v247
    %v253 = vxor.u32 %v252, 2147483648
    %v254 = vmul.f32 %v253, 1.442695
    %v255 = vpow.pop %v254
    %v256 = vadd.f32 %v255, 1.0
    %v257 = vrcp.pop %v256
    %v258 = vmul.f32 1.0, %v257
    %v259 = vtanh.pop %v252
    %v260 = vsel %vm38, %v259, %v258
    %v261 = vmul.f32 %v260, 0.0
    %263 = vrot.lane.b32.xlu0 %v260, 64
    %v264 = vpop.permute.xlu0 %263
    %v266 = vmul.f32 %v260, %v264
    %268 = vrot.lane.b32.xlu0 %v266, 32
    %v269 = vpop.permute.xlu0 %268
    %v271 = vadd.f32 %v261, %v269
    %v272 = vtanh.pop %v271
    %274 = vrot.lane.b32.xlu0 %v272, 64
    %v275 = vpop.permute.xlu0 %274
    %v277 = vmul.f32 %v260, %v275
    %v278 = vpack.c.bf16 %v277, %v277
    %280 = vrot.lane.b32.xlu0 %v278, 32
    %v281 = vpop.permute.xlu0 %280
    %v283 = vsel %vm208, %v281, 0
    %285 = vmatprep.subr.bf16.mxu0 0
    %286 = vmatpush1.bf16.msra.mxu0 %v204
    %287 = vmatprep.subr.bf16.mxu0 0
    %288 = vmatpush1.bf16.msra.mxu0 %v205
    %289 = vmatprep.subr.bf16.mxu0 0
    %290 = vmatpush1.bf16.msra.mxu0 0
    %291 = vmatprep.subr.bf16.mxu0 0
    %292 = vmatpush1.bf16.msra.mxu0 0
    %293 = vmatprep.subr.bf16.mxu0 0
    %294 = vmatpush1.bf16.msra.mxu0 0
    %295 = vmatprep.subr.bf16.mxu0 0
    %296 = vmatpush1.bf16.msra.mxu0 0
    %297 = vmatprep.subr.bf16.mxu0 0
    %298 = vmatpush1.bf16.msra.mxu0 0
    %299 = vmatprep.subr.bf16.mxu0 0
    %300 = vmatpush1.bf16.msra.mxu0 0
    %301 = vmatprep.subr.bf16.mxu0 0
    %302 = vmatpush1.bf16.msra.mxu0 0
    %303 = vmatprep.subr.bf16.mxu0 0
    %304 = vmatpush1.bf16.msra.mxu0 0
    %305 = vmatprep.subr.bf16.mxu0 0
    %306 = vmatpush1.bf16.msra.mxu0 0
    %307 = vmatprep.subr.bf16.mxu0 0
    %308 = vmatpush1.bf16.msra.mxu0 0
    %309 = vmatprep.subr.bf16.mxu0 0
    %310 = vmatpush1.bf16.msra.mxu0 0
    %311 = vmatprep.subr.bf16.mxu0 0
    %312 = vmatpush1.bf16.msra.mxu0 0
    %313 = vmatprep.subr.bf16.mxu0 0
    %314 = vmatpush1.bf16.msra.mxu0 0
    %315 = vmatprep.subr.bf16.mxu0 0
    %316 = vmatpush1.bf16.msra.mxu0 0
    %317 = vmatprep.mubr.bf16.mxu0 0
    %318 = vmatmul.mubr.bf16.gmra.mrb[0].mxu0 %v283
    %v319 = vpop.f32.mrb[0].mxu0
    %v320 = vadd.f32 0.0, %v319
    %v321 = vpop.f32.mrb[0].mxu0
    %v322 = vpop.f32.mrb[0].mxu0
    %v323 = vpop.f32.mrb[0].mxu0
    %324 = vdwg.mxu0
    %v325 = vadd.f32 %v169, %v320
    %v326 = vxor.u32 %v325, 2147483648
    %v327 = vmul.f32 %v326, 1.442695
    %v328 = vpow.pop %v327
    %v329 = vadd.f32 %v328, 1.0
    %v330 = vrcp.pop %v329
    %v331 = vmul.f32 1.0, %v330
    %v332 = vtanh.pop %v325
    %v333 = vsel %vm38, %v332, %v331
    %v334 = vmul.f32 %v333, %v271
    %336 = vrot.lane.b32.xlu0 %v333, 64
    %v337 = vpop.permute.xlu0 %336
    %v339 = vmul.f32 %v333, %v337
    %341 = vrot.lane.b32.xlu0 %v339, 32
    %v342 = vpop.permute.xlu0 %341
    %v344 = vadd.f32 %v334, %v342
    %v345 = vtanh.pop %v344
    %347 = vrot.lane.b32.xlu0 %v345, 64
    %v348 = vpop.permute.xlu0 %347
    %v350 = vmul.f32 %v333, %v348
    %v351 = vpack.c.bf16 %v350, %v350
    %353 = vrot.lane.b32.xlu0 %v351, 32
    %v354 = vpop.permute.xlu0 %353
    %v356 = vsel %vm208, %v354, 0
    %358 = vmatprep.subr.bf16.mxu0 0
    %359 = vmatpush1.bf16.msra.mxu0 %v204
    %360 = vmatprep.subr.bf16.mxu0 0
    %361 = vmatpush1.bf16.msra.mxu0 %v205
    %362 = vmatprep.subr.bf16.mxu0 0
    %363 = vmatpush1.bf16.msra.mxu0 0
    %364 = vmatprep.subr.bf16.mxu0 0
    %365 = vmatpush1.bf16.msra.mxu0 0
    %366 = vmatprep.subr.bf16.mxu0 0
    %367 = vmatpush1.bf16.msra.mxu0 0
    %368 = vmatprep.subr.bf16.mxu0 0
    %369 = vmatpush1.bf16.msra.mxu0 0
    %370 = vmatprep.subr.bf16.mxu0 0
    %371 = vmatpush1.bf16.msra.mxu0 0
    %372 = vmatprep.subr.bf16.mxu0 0
    %373 = vmatpush1.bf16.msra.mxu0 0
    %374 = vmatprep.subr.bf16.mxu0 0
    %375 = vmatpush1.bf16.msra.mxu0 0
    %376 = vmatprep.subr.bf16.mxu0 0
    %377 = vmatpush1.bf16.msra.mxu0 0
    %378 = vmatprep.subr.bf16.mxu0 0
    %379 = vmatpush1.bf16.msra.mxu0 0
    %380 = vmatprep.subr.bf16.mxu0 0
    %381 = vmatpush1.bf16.msra.mxu0 0
    %382 = vmatprep.subr.bf16.mxu0 0
    %383 = vmatpush1.bf16.msra.mxu0 0
    %384 = vmatprep.subr.bf16.mxu0 0
    %385 = vmatpush1.bf16.msra.mxu0 0
    %386 = vmatprep.subr.bf16.mxu0 0
    %387 = vmatpush1.bf16.msra.mxu0 0
    %388 = vmatprep.subr.bf16.mxu0 0
    %389 = vmatpush1.bf16.msra.mxu0 0
    %390 = vmatprep.mubr.bf16.mxu0 0
    %391 = vmatmul.mubr.bf16.gmra.mrb[0].mxu0 %v356
    %v392 = vpop.f32.mrb[0].mxu0
    %v393 = vadd.f32 0.0, %v392
    %v394 = vpop.f32.mrb[0].mxu0
    %v395 = vpop.f32.mrb[0].mxu0
    %v396 = vpop.f32.mrb[0].mxu0
    %397 = vdwg.mxu0
    %v398 = vadd.f32 %v174, %v393
    %v399 = vxor.u32 %v398, 2147483648
    %v400 = vmul.f32 %v399, 1.442695
    %v401 = vpow.pop %v400
    %v402 = vadd.f32 %v401, 1.0
    %v403 = vrcp.pop %v402
    %v404 = vmul.f32 1.0, %v403
    %v405 = vtanh.pop %v398
    %v406 = vsel %vm38, %v405, %v404
    %v407 = vmul.f32 %v406, %v344
    %409 = vrot.lane.b32.xlu0 %v406, 64
    %v410 = vpop.permute.xlu0 %409
    %v412 = vmul.f32 %v406, %v410
    %414 = vrot.lane.b32.xlu0 %v412, 32
    %v415 = vpop.permute.xlu0 %414
    %v417 = vadd.f32 %v407, %v415
    %v418 = vtanh.pop %v417
    %420 = vrot.lane.b32.xlu0 %v418, 64
    %v421 = vpop.permute.xlu0 %420
    %v423 = vmul.f32 %v406, %v421
    %v424 = vpack.c.bf16 %v423, %v423
    %426 = vrot.lane.b32.xlu0 %v424, 32
    %v427 = vpop.permute.xlu0 %426
    %v429 = vsel %vm208, %v427, 0
    %431 = vmatprep.subr.bf16.mxu0 0
    %432 = vmatpush1.bf16.msra.mxu0 %v204
    %433 = vmatprep.subr.bf16.mxu0 0
    %434 = vmatpush1.bf16.msra.mxu0 %v205
    %435 = vmatprep.subr.bf16.mxu0 0
    %436 = vmatpush1.bf16.msra.mxu0 0
    %437 = vmatprep.subr.bf16.mxu0 0
    %438 = vmatpush1.bf16.msra.mxu0 0
    %439 = vmatprep.subr.bf16.mxu0 0
    %440 = vmatpush1.bf16.msra.mxu0 0
    %441 = vmatprep.subr.bf16.mxu0 0
    %442 = vmatpush1.bf16.msra.mxu0 0
    %443 = vmatprep.subr.bf16.mxu0 0
    %444 = vmatpush1.bf16.msra.mxu0 0
    %445 = vmatprep.subr.bf16.mxu0 0
    %446 = vmatpush1.bf16.msra.mxu0 0
    %447 = vmatprep.subr.bf16.mxu0 0
    %448 = vmatpush1.bf16.msra.mxu0 0
    %449 = vmatprep.subr.bf16.mxu0 0
    %450 = vmatpush1.bf16.msra.mxu0 0
    %451 = vmatprep.subr.bf16.mxu0 0
    %452 = vmatpush1.bf16.msra.mxu0 0
    %453 = vmatprep.subr.bf16.mxu0 0
    %454 = vmatpush1.bf16.msra.mxu0 0
    %455 = vmatprep.subr.bf16.mxu0 0
    %456 = vmatpush1.bf16.msra.mxu0 0
    %457 = vmatprep.subr.bf16.mxu0 0
    %458 = vmatpush1.bf16.msra.mxu0 0
    %459 = vmatprep.subr.bf16.mxu0 0
    %460 = vmatpush1.bf16.msra.mxu0 0
    %461 = vmatprep.subr.bf16.mxu0 0
    %462 = vmatpush1.bf16.msra.mxu0 0
    %463 = vmatprep.mubr.bf16.mxu0 0
    %464 = vmatmul.mubr.bf16.gmra.mrb[0].mxu0 %v429
    %v465 = vpop.f32.mrb[0].mxu0
    %v466 = vadd.f32 0.0, %v465
    %v467 = vpop.f32.mrb[0].mxu0
    %v468 = vpop.f32.mrb[0].mxu0
    %v469 = vpop.f32.mrb[0].mxu0
    %470 = vdwg.mxu0
    %v471 = vadd.f32 %v177, %v466
    %v472 = vxor.u32 %v471, 2147483648
    %v473 = vmul.f32 %v472, 1.442695
    %v474 = vpow.pop %v473
    %v475 = vadd.f32 %v474, 1.0
    %v476 = vrcp.pop %v475
    %v477 = vmul.f32 1.0, %v476
    %v478 = vtanh.pop %v471
    %v479 = vsel %vm38, %v478, %v477
    %v480 = vmul.f32 %v479, %v417
    %482 = vrot.lane.b32.xlu0 %v479, 64
    %v483 = vpop.permute.xlu0 %482
    %v485 = vmul.f32 %v479, %v483
    %487 = vrot.lane.b32.xlu0 %v485, 32
    %v488 = vpop.permute.xlu0 %487
    %v490 = vadd.f32 %v480, %v488
    %v491 = vtanh.pop %v490
    %493 = vrot.lane.b32.xlu0 %v491, 64
    %v494 = vpop.permute.xlu0 %493
    %v496 = vmul.f32 %v479, %v494
    %v497 = vpack.c.bf16 %v496, %v496
    %499 = vrot.lane.b32.xlu0 %v497, 32
    %v500 = vpop.permute.xlu0 %499
    %v502 = vsel %vm208, %v500, 0
    %504 = vmatprep.subr.bf16.mxu0 0
    %505 = vmatpush1.bf16.msra.mxu0 %v204
    %506 = vmatprep.subr.bf16.mxu0 0
    %507 = vmatpush1.bf16.msra.mxu0 %v205
    %508 = vmatprep.subr.bf16.mxu0 0
    %509 = vmatpush1.bf16.msra.mxu0 0
    %510 = vmatprep.subr.bf16.mxu0 0
    %511 = vmatpush1.bf16.msra.mxu0 0
    %512 = vmatprep.subr.bf16.mxu0 0
    %513 = vmatpush1.bf16.msra.mxu0 0
    %514 = vmatprep.subr.bf16.mxu0 0
    %515 = vmatpush1.bf16.msra.mxu0 0
    %516 = vmatprep.subr.bf16.mxu0 0
    %517 = vmatpush1.bf16.msra.mxu0 0
    %518 = vmatprep.subr.bf16.mxu0 0
    %519 = vmatpush1.bf16.msra.mxu0 0
    %520 = vmatprep.subr.bf16.mxu0 0
    %521 = vmatpush1.bf16.msra.mxu0 0
    %522 = vmatprep.subr.bf16.mxu0 0
    %523 = vmatpush1.bf16.msra.mxu0 0
    %524 = vmatprep.subr.bf16.mxu0 0
    %525 = vmatpush1.bf16.msra.mxu0 0
    %526 = vmatprep.subr.bf16.mxu0 0
    %527 = vmatpush1.bf16.msra.mxu0 0
    %528 = vmatprep.subr.bf16.mxu0 0
    %529 = vmatpush1.bf16.msra.mxu0 0
    %530 = vmatprep.subr.bf16.mxu0 0
    %531 = vmatpush1.bf16.msra.mxu0 0
    %532 = vmatprep.subr.bf16.mxu0 0
    %533 = vmatpush1.bf16.msra.mxu0 0
    %534 = vmatprep.subr.bf16.mxu0 0
    %535 = vmatpush1.bf16.msra.mxu0 0
    %536 = vmatprep.mubr.bf16.mxu0 0
    %537 = vmatmul.mubr.bf16.gmra.mrb[0].mxu0 %v502
    %v538 = vpop.f32.mrb[0].mxu0
    %v539 = vadd.f32 0.0, %v538
    %v540 = vpop.f32.mrb[0].mxu0
    %v541 = vpop.f32.mrb[0].mxu0
    %v542 = vpop.f32.mrb[0].mxu0
    %543 = vdwg.mxu0
    %v544 = vadd.f32 %v182, %v539
    %v545 = vxor.u32 %v544, 2147483648
    %v546 = vmul.f32 %v545, 1.442695
    %v547 = vpow.pop %v546
    %v548 = vadd.f32 %v547, 1.0
    %v549 = vrcp.pop %v548
    %v550 = vmul.f32 1.0, %v549
    %v551 = vtanh.pop %v544
    %v552 = vsel %vm38, %v551, %v550
    %v553 = vmul.f32 %v552, %v490
    %555 = vrot.lane.b32.xlu0 %v552, 64
    %v556 = vpop.permute.xlu0 %555
    %v558 = vmul.f32 %v552, %v556
    %560 = vrot.lane.b32.xlu0 %v558, 32
    %v561 = vpop.permute.xlu0 %560
    %v563 = vadd.f32 %v553, %v561
    %v564 = vtanh.pop %v563
    %566 = vrot.lane.b32.xlu0 %v564, 64
    %v567 = vpop.permute.xlu0 %566
    %v569 = vmul.f32 %v552, %v567
    %v570 = vpack.c.bf16 %v569, %v569
    %572 = vrot.lane.b32.xlu0 %v570, 32
    %v573 = vpop.permute.xlu0 %572
    %v575 = vsel %vm208, %v573, 0
    %577 = vmatprep.subr.bf16.mxu0 0
    %578 = vmatpush1.bf16.msra.mxu0 %v204
    %579 = vmatprep.subr.bf16.mxu0 0
    %580 = vmatpush1.bf16.msra.mxu0 %v205
    %581 = vmatprep.subr.bf16.mxu0 0
    %582 = vmatpush1.bf16.msra.mxu0 0
    %583 = vmatprep.subr.bf16.mxu0 0
    %584 = vmatpush1.bf16.msra.mxu0 0
    %585 = vmatprep.subr.bf16.mxu0 0
    %586 = vmatpush1.bf16.msra.mxu0 0
    %587 = vmatprep.subr.bf16.mxu0 0
    %588 = vmatpush1.bf16.msra.mxu0 0
    %589 = vmatprep.subr.bf16.mxu0 0
    %590 = vmatpush1.bf16.msra.mxu0 0
    %591 = vmatprep.subr.bf16.mxu0 0
    %592 = vmatpush1.bf16.msra.mxu0 0
    %593 = vmatprep.subr.bf16.mxu0 0
    %594 = vmatpush1.bf16.msra.mxu0 0
    %595 = vmatprep.subr.bf16.mxu0 0
    %596 = vmatpush1.bf16.msra.mxu0 0
    %597 = vmatprep.subr.bf16.mxu0 0
    %598 = vmatpush1.bf16.msra.mxu0 0
    %599 = vmatprep.subr.bf16.mxu0 0
    %600 = vmatpush1.bf16.msra.mxu0 0
    %601 = vmatprep.subr.bf16.mxu0 0
    %602 = vmatpush1.bf16.msra.mxu0 0
    %603 = vmatprep.subr.bf16.mxu0 0
    %604 = vmatpush1.bf16.msra.mxu0 0
    %605 = vmatprep.subr.bf16.mxu0 0
    %606 = vmatpush1.bf16.msra.mxu0 0
    %607 = vmatprep.subr.bf16.mxu0 0
    %608 = vmatpush1.bf16.msra.mxu0 0
    %609 = vmatprep.mubr.bf16.mxu0 0
    %610 = vmatmul.mubr.bf16.gmra.mrb[0].mxu0 %v575
    %v611 = vpop.f32.mrb[0].mxu0
    %v612 = vadd.f32 0.0, %v611
    %v613 = vpop.f32.mrb[0].mxu0
    %v614 = vpop.f32.mrb[0].mxu0
    %v615 = vpop.f32.mrb[0].mxu0
    %616 = vdwg.mxu0
    %v617 = vadd.f32 %v185, %v612
    %v618 = vxor.u32 %v617, 2147483648
    %v619 = vmul.f32 %v618, 1.442695
    %v620 = vpow.pop %v619
    %v621 = vadd.f32 %v620, 1.0
    %v622 = vrcp.pop %v621
    %v623 = vmul.f32 1.0, %v622
    %v624 = vtanh.pop %v617
    %v625 = vsel %vm38, %v624, %v623
    %v626 = vmul.f32 %v625, %v563
    %628 = vrot.lane.b32.xlu0 %v625, 64
    %v629 = vpop.permute.xlu0 %628
    %v631 = vmul.f32 %v625, %v629
    %633 = vrot.lane.b32.xlu0 %v631, 32
    %v634 = vpop.permute.xlu0 %633
    %v636 = vadd.f32 %v626, %v634
    %v637 = vtanh.pop %v636
    %639 = vrot.lane.b32.xlu0 %v637, 64
    %v640 = vpop.permute.xlu0 %639
    %v642 = vmul.f32 %v625, %v640
    %v643 = vpack.c.bf16 %v642, %v642
    %645 = vrot.lane.b32.xlu0 %v643, 32
    %v646 = vpop.permute.xlu0 %645
    %v648 = vsel %vm208, %v646, 0
    %650 = vmatprep.subr.bf16.mxu0 0
    %651 = vmatpush1.bf16.msra.mxu0 %v204
    %652 = vmatprep.subr.bf16.mxu0 0
    %653 = vmatpush1.bf16.msra.mxu0 %v205
    %654 = vmatprep.subr.bf16.mxu0 0
    %655 = vmatpush1.bf16.msra.mxu0 0
    %656 = vmatprep.subr.bf16.mxu0 0
    %657 = vmatpush1.bf16.msra.mxu0 0
    %658 = vmatprep.subr.bf16.mxu0 0
    %659 = vmatpush1.bf16.msra.mxu0 0
    %660 = vmatprep.subr.bf16.mxu0 0
    %661 = vmatpush1.bf16.msra.mxu0 0
    %662 = vmatprep.subr.bf16.mxu0 0
    %663 = vmatpush1.bf16.msra.mxu0 0
    %664 = vmatprep.subr.bf16.mxu0 0
    %665 = vmatpush1.bf16.msra.mxu0 0
    %666 = vmatprep.subr.bf16.mxu0 0
    %667 = vmatpush1.bf16.msra.mxu0 0
    %668 = vmatprep.subr.bf16.mxu0 0
    %669 = vmatpush1.bf16.msra.mxu0 0
    %670 = vmatprep.subr.bf16.mxu0 0
    %671 = vmatpush1.bf16.msra.mxu0 0
    %672 = vmatprep.subr.bf16.mxu0 0
    %673 = vmatpush1.bf16.msra.mxu0 0
    %674 = vmatprep.subr.bf16.mxu0 0
    %675 = vmatpush1.bf16.msra.mxu0 0
    %676 = vmatprep.subr.bf16.mxu0 0
    %677 = vmatpush1.bf16.msra.mxu0 0
    %678 = vmatprep.subr.bf16.mxu0 0
    %679 = vmatpush1.bf16.msra.mxu0 0
    %680 = vmatprep.subr.bf16.mxu0 0
    %681 = vmatpush1.bf16.msra.mxu0 0
    %682 = vmatprep.mubr.bf16.mxu0 0
    %683 = vmatmul.mubr.bf16.gmra.mrb[0].mxu0 %v648
    %v684 = vpop.f32.mrb[0].mxu0
    %v685 = vadd.f32 0.0, %v684
    %v686 = vpop.f32.mrb[0].mxu0
    %v687 = vpop.f32.mrb[0].mxu0
    %v688 = vpop.f32.mrb[0].mxu0
    %689 = vdwg.mxu0
    %v690 = vadd.f32 %v190, %v685
    %v691 = vxor.u32 %v690, 2147483648
    %v692 = vmul.f32 %v691, 1.442695
    %v693 = vpow.pop %v692
    %v694 = vadd.f32 %v693, 1.0
    %v695 = vrcp.pop %v694
    %v696 = vmul.f32 1.0, %v695
    %v697 = vtanh.pop %v690
    %v698 = vsel %vm38, %v697, %v696
    %v699 = vmul.f32 %v698, %v636
    %701 = vrot.lane.b32.xlu0 %v698, 64
    %v702 = vpop.permute.xlu0 %701
    %v704 = vmul.f32 %v698, %v702
    %706 = vrot.lane.b32.xlu0 %v704, 32
    %v707 = vpop.permute.xlu0 %706
    %v709 = vadd.f32 %v699, %v707
    %v710 = vtanh.pop %v709
    %712 = vrot.lane.b32.xlu0 %v710, 64
    %v713 = vpop.permute.xlu0 %712
    %v715 = vmul.f32 %v698, %v713
    %v716 = vpack.c.bf16 %v715, %v715
    %718 = vrot.lane.b32.xlu0 %v716, 32
    %v719 = vpop.permute.xlu0 %718
    %v721 = vsel %vm208, %v719, 0
    %723 = vmatprep.subr.bf16.mxu0 0
    %724 = vmatpush1.bf16.msra.mxu0 %v204
    %725 = vmatprep.subr.bf16.mxu0 0
    %726 = vmatpush1.bf16.msra.mxu0 %v205
    %727 = vmatprep.subr.bf16.mxu0 0
    %728 = vmatpush1.bf16.msra.mxu0 0
    %729 = vmatprep.subr.bf16.mxu0 0
    %730 = vmatpush1.bf16.msra.mxu0 0
    %731 = vmatprep.subr.bf16.mxu0 0
    %732 = vmatpush1.bf16.msra.mxu0 0
    %733 = vmatprep.subr.bf16.mxu0 0
    %734 = vmatpush1.bf16.msra.mxu0 0
    %735 = vmatprep.subr.bf16.mxu0 0
    %736 = vmatpush1.bf16.msra.mxu0 0
    %737 = vmatprep.subr.bf16.mxu0 0
    %738 = vmatpush1.bf16.msra.mxu0 0
    %739 = vmatprep.subr.bf16.mxu0 0
    %740 = vmatpush1.bf16.msra.mxu0 0
    %741 = vmatprep.subr.bf16.mxu0 0
    %742 = vmatpush1.bf16.msra.mxu0 0
    %743 = vmatprep.subr.bf16.mxu0 0
    %744 = vmatpush1.bf16.msra.mxu0 0
    %745 = vmatprep.subr.bf16.mxu0 0
    %746 = vmatpush1.bf16.msra.mxu0 0
    %747 = vmatprep.subr.bf16.mxu0 0
    %748 = vmatpush1.bf16.msra.mxu0 0
    %749 = vmatprep.subr.bf16.mxu0 0
    %750 = vmatpush1.bf16.msra.mxu0 0
    %751 = vmatprep.subr.bf16.mxu0 0
    %752 = vmatpush1.bf16.msra.mxu0 0
    %753 = vmatprep.subr.bf16.mxu0 0
    %754 = vmatpush1.bf16.msra.mxu0 0
    %755 = vmatprep.mubr.bf16.mxu0 0
    %756 = vmatmul.mubr.bf16.gmra.mrb[0].mxu0 %v721
    %v757 = vpop.f32.mrb[0].mxu0
    %v758 = vadd.f32 0.0, %v757
    %v759 = vpop.f32.mrb[0].mxu0
    %v760 = vpop.f32.mrb[0].mxu0
    %v761 = vpop.f32.mrb[0].mxu0
    %762 = vdwg.mxu0
    %v763 = vadd.f32 %v193, %v758
    %v764 = vxor.u32 %v763, 2147483648
    %v765 = vmul.f32 %v764, 1.442695
    %v766 = vpow.pop %v765
    %v767 = vadd.f32 %v766, 1.0
    %v768 = vrcp.pop %v767
    %v769 = vmul.f32 1.0, %v768
    %v770 = vtanh.pop %v763
    %v771 = vsel %vm38, %v770, %v769
    %v772 = vmul.f32 %v771, %v709
    %774 = vrot.lane.b32.xlu0 %v771, 64
    %v775 = vpop.permute.xlu0 %774
    %v777 = vmul.f32 %v771, %v775
    %779 = vrot.lane.b32.xlu0 %v777, 32
    %v780 = vpop.permute.xlu0 %779
    %v782 = vadd.f32 %v772, %v780
    %v783 = vtanh.pop %v782
    %785 = vrot.lane.b32.xlu0 %v783, 64
    %v786 = vpop.permute.xlu0 %785
    %v788 = vmul.f32 %v771, %v786
    %v789 = vld [vmem:[%s4] sm:$0xf]
    %v790 = vld [vmem:[%s4 + $0x4] sm:$0xf]
    %v791 = vld [vmem:[%s4 + $0x8] sm:$0xf]
    %v792 = vld [vmem:[%s4 + $0xc] sm:$0xf]
    %v793 = vld [vmem:[%s5] sm:$0xf]
    %v794 = vld [vmem:[%s5 + $0x4] sm:$0xf]
    %v795 = vld [vmem:[%s5 + $0x8] sm:$0xf]
    %v796 = vld [vmem:[%s5 + $0xc] sm:$0xf]
    %v797 = vld [vmem:[%s6] sm:$0x1]
    %v798 = vpack.c.bf16 %v350, %v277
    %v799 = vpack.c.bf16 %v496, %v423
    %v800 = vpack.c.bf16 %v642, %v569
    %v801 = vpack.c.bf16 %v788, %v715
    %v803 = vlaneseq
    %v804 = vshrl.u32 %v803, 7
    %v805 = vsub.s32 0, %v804
    %v806 = vrot.slane %v797, %v805
    %812 = vrot.lane.b32.xlu0 %v798, 32
    %v813 = vpop.permute.xlu0 %812
    %814 = vrot.lane.b32.xlu0 %v799, 32
    %v815 = vpop.permute.xlu0 %814
    %816 = vrot.lane.b32.xlu0 %v800, 32
    %v817 = vpop.permute.xlu0 %816
    %818 = vrot.lane.b32.xlu0 %v801, 32
    %v819 = vpop.permute.xlu0 %818
    %v824 = vunpack.c.l.b16 %v789
    %v825 = vunpack.c.l.b16 %v790
    %v826 = vunpack.c.l.b16 %v791
    %v827 = vunpack.c.l.b16 %v792
    %v828 = vpack.c.b16 %v825, %v824
    %v829 = vpack.c.b16 %v827, %v826
    %v833 = vsel %vm208, %v813, 0
    %v836 = vsel %vm208, %v815, 0
    %v839 = vsel %vm208, %v817, 0
    %v842 = vsel %vm208, %v819, 0
    %844 = vmatprep.subr.bf16.mxu0 0
    %845 = vmatpush1.bf16.msra.mxu0 %v828
    %846 = vmatprep.subr.bf16.mxu0 0
    %847 = vmatpush1.bf16.msra.mxu0 %v829
    %848 = vmatprep.subr.bf16.mxu0 0
    %849 = vmatpush1.bf16.msra.mxu0 0
    %850 = vmatprep.subr.bf16.mxu0 0
    %851 = vmatpush1.bf16.msra.mxu0 0
    %852 = vmatprep.subr.bf16.mxu0 0
    %853 = vmatpush1.bf16.msra.mxu0 0
    %854 = vmatprep.subr.bf16.mxu0 0
    %855 = vmatpush1.bf16.msra.mxu0 0
    %856 = vmatprep.subr.bf16.mxu0 0
    %857 = vmatpush1.bf16.msra.mxu0 0
    %858 = vmatprep.subr.bf16.mxu0 0
    %859 = vmatpush1.bf16.msra.mxu0 0
    %860 = vmatprep.subr.bf16.mxu0 0
    %861 = vmatpush1.bf16.msra.mxu0 0
    %862 = vmatprep.subr.bf16.mxu0 0
    %863 = vmatpush1.bf16.msra.mxu0 0
    %864 = vmatprep.subr.bf16.mxu0 0
    %865 = vmatpush1.bf16.msra.mxu0 0
    %866 = vmatprep.subr.bf16.mxu0 0
    %867 = vmatpush1.bf16.msra.mxu0 0
    %868 = vmatprep.subr.bf16.mxu0 0
    %869 = vmatpush1.bf16.msra.mxu0 0
    %870 = vmatprep.subr.bf16.mxu0 0
    %871 = vmatpush1.bf16.msra.mxu0 0
    %872 = vmatprep.subr.bf16.mxu0 0
    %873 = vmatpush1.bf16.msra.mxu0 0
    %874 = vmatprep.subr.bf16.mxu0 0
    %875 = vmatpush1.bf16.msra.mxu0 0
    %876 = vmatprep.mubr.bf16.mxu0 0
    %877 = vmatmul.mubr.bf16.gmra.mrb[0].mxu0 %v833
    %v878 = vpop.f32.mrb[0].mxu0
    %v879 = vadd.f32 %v806, %v878
    %v880 = vpop.f32.mrb[0].mxu0
    %v881 = vpop.f32.mrb[0].mxu0
    %v882 = vadd.f32 %v806, %v881
    %v883 = vpop.f32.mrb[0].mxu0
    %884 = vmatprep.mubr.bf16.mxu0 0
    %885 = vmatmul.mubr.bf16.gmra.mrb[0].mxu0 %v836
    %v886 = vpop.f32.mrb[0].mxu0
    %v887 = vadd.f32 %v806, %v886
    %v888 = vpop.f32.mrb[0].mxu0
    %v889 = vpop.f32.mrb[0].mxu0
    %v890 = vadd.f32 %v806, %v889
    %v891 = vpop.f32.mrb[0].mxu0
    %892 = vmatprep.mubr.bf16.mxu0 0
    %893 = vmatmul.mubr.bf16.gmra.mrb[0].mxu0 %v839
    %v894 = vpop.f32.mrb[0].mxu0
    %v895 = vadd.f32 %v806, %v894
    %v896 = vpop.f32.mrb[0].mxu0
    %v897 = vpop.f32.mrb[0].mxu0
    %v898 = vadd.f32 %v806, %v897
    %v899 = vpop.f32.mrb[0].mxu0
    %900 = vmatprep.mubr.bf16.mxu0 0
    %901 = vmatmul.mubr.bf16.gmra.mrb[0].mxu0 %v842
    %v902 = vpop.f32.mrb[0].mxu0
    %v903 = vadd.f32 %v806, %v902
    %v904 = vpop.f32.mrb[0].mxu0
    %v905 = vpop.f32.mrb[0].mxu0
    %v906 = vadd.f32 %v806, %v905
    %v907 = vpop.f32.mrb[0].mxu0
    %908 = vdwg.mxu0
    %v913 = vunpack.c.l.b16 %v793
    %v914 = vunpack.c.l.b16 %v794
    %v915 = vunpack.c.l.b16 %v795
    %v916 = vunpack.c.l.b16 %v796
    %v917 = vpack.c.b16 %v914, %v913
    %v918 = vpack.c.b16 %v916, %v915
    %921 = vmatprep.subr.bf16.mxu0 0
    %922 = vmatpush1.bf16.msra.mxu0 %v917
    %923 = vmatprep.subr.bf16.mxu0 0
    %924 = vmatpush1.bf16.msra.mxu0 %v918
    %925 = vmatprep.subr.bf16.mxu0 0
    %926 = vmatpush1.bf16.msra.mxu0 0
    %927 = vmatprep.subr.bf16.mxu0 0
    %928 = vmatpush1.bf16.msra.mxu0 0
    %929 = vmatprep.subr.bf16.mxu0 0
    %930 = vmatpush1.bf16.msra.mxu0 0
    %931 = vmatprep.subr.bf16.mxu0 0
    %932 = vmatpush1.bf16.msra.mxu0 0
    %933 = vmatprep.subr.bf16.mxu0 0
    %934 = vmatpush1.bf16.msra.mxu0 0
    %935 = vmatprep.subr.bf16.mxu0 0
    %936 = vmatpush1.bf16.msra.mxu0 0
    %937 = vmatprep.subr.bf16.mxu0 0
    %938 = vmatpush1.bf16.msra.mxu0 0
    %939 = vmatprep.subr.bf16.mxu0 0
    %940 = vmatpush1.bf16.msra.mxu0 0
    %941 = vmatprep.subr.bf16.mxu0 0
    %942 = vmatpush1.bf16.msra.mxu0 0
    %943 = vmatprep.subr.bf16.mxu0 0
    %944 = vmatpush1.bf16.msra.mxu0 0
    %945 = vmatprep.subr.bf16.mxu0 0
    %946 = vmatpush1.bf16.msra.mxu0 0
    %947 = vmatprep.subr.bf16.mxu0 0
    %948 = vmatpush1.bf16.msra.mxu0 0
    %949 = vmatprep.subr.bf16.mxu0 0
    %950 = vmatpush1.bf16.msra.mxu0 0
    %951 = vmatprep.subr.bf16.mxu0 0
    %952 = vmatpush1.bf16.msra.mxu0 0
    %953 = vmatprep.mubr.bf16.mxu0 0
    %954 = vmatmul.mubr.bf16.gmra.mrb[0].mxu0 %v210
    %v955 = vpop.f32.mrb[0].mxu0
    %v956 = vadd.f32 0.0, %v955
    %v957 = vpop.f32.mrb[0].mxu0
    %v958 = vpop.f32.mrb[0].mxu0
    %v959 = vpop.f32.mrb[0].mxu0
    %960 = vdwg.mxu0
    %v961 = vadd.f32 %v879, %v956
    %v962 = vxor.u32 %v961, 2147483648
    %v963 = vmul.f32 %v962, 1.442695
    %v964 = vpow.pop %v963
    %v965 = vadd.f32 %v964, 1.0
    %v966 = vrcp.pop %v965
    %v967 = vmul.f32 1.0, %v966
    %v968 = vtanh.pop %v961
    %v969 = vsel %vm38, %v968, %v967
    %v970 = vmul.f32 %v969, 0.0
    %972 = vrot.lane.b32.xlu0 %v969, 64
    %v973 = vpop.permute.xlu0 %972
    %v975 = vmul.f32 %v969, %v973
    %977 = vrot.lane.b32.xlu0 %v975, 32
    %v978 = vpop.permute.xlu0 %977
    %v980 = vadd.f32 %v970, %v978
    %v981 = vtanh.pop %v980
    %983 = vrot.lane.b32.xlu0 %v981, 64
    %v984 = vpop.permute.xlu0 %983
    %v986 = vmul.f32 %v969, %v984
    %v987 = vpack.c.bf16 %v986, %v986
    %989 = vrot.lane.b32.xlu0 %v987, 32
    %v990 = vpop.permute.xlu0 %989
    %v992 = vsel %vm208, %v990, 0
    %994 = vmatprep.subr.bf16.mxu0 0
    %995 = vmatpush1.bf16.msra.mxu0 %v917
    %996 = vmatprep.subr.bf16.mxu0 0
    %997 = vmatpush1.bf16.msra.mxu0 %v918
    %998 = vmatprep.subr.bf16.mxu0 0
    %999 = vmatpush1.bf16.msra.mxu0 0
    %1000 = vmatprep.subr.bf16.mxu0 0
    %1001 = vmatpush1.bf16.msra.mxu0 0
    %1002 = vmatprep.subr.bf16.mxu0 0
    %1003 = vmatpush1.bf16.msra.mxu0 0
    %1004 = vmatprep.subr.bf16.mxu0 0
    %1005 = vmatpush1.bf16.msra.mxu0 0
    %1006 = vmatprep.subr.bf16.mxu0 0
    %1007 = vmatpush1.bf16.msra.mxu0 0
    %1008 = vmatprep.subr.bf16.mxu0 0
    %1009 = vmatpush1.bf16.msra.mxu0 0
    %1010 = vmatprep.subr.bf16.mxu0 0
    %1011 = vmatpush1.bf16.msra.mxu0 0
    %1012 = vmatprep.subr.bf16.mxu0 0
    %1013 = vmatpush1.bf16.msra.mxu0 0
    %1014 = vmatprep.subr.bf16.mxu0 0
    %1015 = vmatpush1.bf16.msra.mxu0 0
    %1016 = vmatprep.subr.bf16.mxu0 0
    %1017 = vmatpush1.bf16.msra.mxu0 0
    %1018 = vmatprep.subr.bf16.mxu0 0
    %1019 = vmatpush1.bf16.msra.mxu0 0
    %1020 = vmatprep.subr.bf16.mxu0 0
    %1021 = vmatpush1.bf16.msra.mxu0 0
    %1022 = vmatprep.subr.bf16.mxu0 0
    %1023 = vmatpush1.bf16.msra.mxu0 0
    %1024 = vmatprep.subr.bf16.mxu0 0
    %1025 = vmatpush1.bf16.msra.mxu0 0
    %1026 = vmatprep.mubr.bf16.mxu0 0
    %1027 = vmatmul.mubr.bf16.gmra.mrb[0].mxu0 %v992
    %v1028 = vpop.f32.mrb[0].mxu0
    %v1029 = vadd.f32 0.0, %v1028
    %v1030 = vpop.f32.mrb[0].mxu0
    %v1031 = vpop.f32.mrb[0].mxu0
    %v1032 = vpop.f32.mrb[0].mxu0
    %1033 = vdwg.mxu0
    %v1034 = vadd.f32 %v882, %v1029
    %v1035 = vxor.u32 %v1034, 2147483648
    %v1036 = vmul.f32 %v1035, 1.442695
    %v1037 = vpow.pop %v1036
    %v1038 = vadd.f32 %v1037, 1.0
    %v1039 = vrcp.pop %v1038
    %v1040 = vmul.f32 1.0, %v1039
    %v1041 = vtanh.pop %v1034
    %v1042 = vsel %vm38, %v1041, %v1040
    %v1043 = vmul.f32 %v1042, %v980
    %1045 = vrot.lane.b32.xlu0 %v1042, 64
    %v1046 = vpop.permute.xlu0 %1045
    %v1048 = vmul.f32 %v1042, %v1046
    %1050 = vrot.lane.b32.xlu0 %v1048, 32
    %v1051 = vpop.permute.xlu0 %1050
    %v1053 = vadd.f32 %v1043, %v1051
    %v1054 = vtanh.pop %v1053
    %1056 = vrot.lane.b32.xlu0 %v1054, 64
    %v1057 = vpop.permute.xlu0 %1056
    %v1059 = vmul.f32 %v1042, %v1057
    %v1060 = vpack.c.bf16 %v1059, %v1059
    %1062 = vrot.lane.b32.xlu0 %v1060, 32
    %v1063 = vpop.permute.xlu0 %1062
    %v1068 = vunpack.c.l.b16 %v43
    %v1069 = vunpack.c.l.b16 %v44
    %v1070 = vunpack.c.l.b16 %v45
    %v1071 = vunpack.c.l.b16 %v46
    %v1072 = vpack.c.b16 %v1069, %v1068
    %v1073 = vpack.c.b16 %v1071, %v1070
    %v1077 = vsel %vm208, %v1063, 0
    %1079 = vmatprep.subr.bf16.mxu0 0
    %1080 = vmatpush1.bf16.msra.mxu0 %v1072
    %1081 = vmatprep.subr.bf16.mxu0 0
    %1082 = vmatpush1.bf16.msra.mxu0 %v1073
    %1083 = vmatprep.subr.bf16.mxu0 0
    %1084 = vmatpush1.bf16.msra.mxu0 0
    %1085 = vmatprep.subr.bf16.mxu0 0
    %1086 = vmatpush1.bf16.msra.mxu0 0
    %1087 = vmatprep.subr.bf16.mxu0 0
    %1088 = vmatpush1.bf16.msra.mxu0 0
    %1089 = vmatprep.subr.bf16.mxu0 0
    %1090 = vmatpush1.bf16.msra.mxu0 0
    %1091 = vmatprep.subr.bf16.mxu0 0
    %1092 = vmatpush1.bf16.msra.mxu0 0
    %1093 = vmatprep.subr.bf16.mxu0 0
    %1094 = vmatpush1.bf16.msra.mxu0 0
    %1095 = vmatprep.subr.bf16.mxu0 0
    %1096 = vmatpush1.bf16.msra.mxu0 0
    %1097 = vmatprep.subr.bf16.mxu0 0
    %1098 = vmatpush1.bf16.msra.mxu0 0
    %1099 = vmatprep.subr.bf16.mxu0 0
    %1100 = vmatpush1.bf16.msra.mxu0 0
    %1101 = vmatprep.subr.bf16.mxu0 0
    %1102 = vmatpush1.bf16.msra.mxu0 0
    %1103 = vmatprep.subr.bf16.mxu0 0
    %1104 = vmatpush1.bf16.msra.mxu0 0
    %1105 = vmatprep.subr.bf16.mxu0 0
    %1106 = vmatpush1.bf16.msra.mxu0 0
    %1107 = vmatprep.subr.bf16.mxu0 0
    %1108 = vmatpush1.bf16.msra.mxu0 0
    %1109 = vmatprep.subr.bf16.mxu0 0
    %1110 = vmatpush1.bf16.msra.mxu0 0
    %1111 = vmatprep.mubr.bf16.mxu0 0
    %1112 = vmatmul.mubr.bf16.gmra.mrb[0].mxu0 %v1077
    %v1113 = vpop.f32.mrb[0].mxu0
    %v1114 = vadd.f32 0.0, %v1113
    %v1115 = vpop.f32.mrb[0].mxu0
    %v1116 = vpop.f32.mrb[0].mxu0
    %v1117 = vpop.f32.mrb[0].mxu0
    %1118 = vdwg.mxu0
    %v1123 = vunpack.c.l.b16 %v39
    %v1124 = vunpack.c.l.b16 %v40
    %v1125 = vunpack.c.l.b16 %v41
    %v1126 = vunpack.c.l.b16 %v42
    %v1127 = vpack.c.b16 %v1124, %v1123
    %v1128 = vpack.c.b16 %v1126, %v1125
    %1131 = vmatprep.subr.bf16.mxu0 0
    %1132 = vmatpush1.bf16.msra.mxu0 %v1127
    %1133 = vmatprep.subr.bf16.mxu0 0
    %1134 = vmatpush1.bf16.msra.mxu0 %v1128
    %1135 = vmatprep.subr.bf16.mxu0 0
    %1136 = vmatpush1.bf16.msra.mxu0 0
    %1137 = vmatprep.subr.bf16.mxu0 0
    %1138 = vmatpush1.bf16.msra.mxu0 0
    %1139 = vmatprep.subr.bf16.mxu0 0
    %1140 = vmatpush1.bf16.msra.mxu0 0
    %1141 = vmatprep.subr.bf16.mxu0 0
    %1142 = vmatpush1.bf16.msra.mxu0 0
    %1143 = vmatprep.subr.bf16.mxu0 0
    %1144 = vmatpush1.bf16.msra.mxu0 0
    %1145 = vmatprep.subr.bf16.mxu0 0
    %1146 = vmatpush1.bf16.msra.mxu0 0
    %1147 = vmatprep.subr.bf16.mxu0 0
    %1148 = vmatpush1.bf16.msra.mxu0 0
    %1149 = vmatprep.subr.bf16.mxu0 0
    %1150 = vmatpush1.bf16.msra.mxu0 0
    %1151 = vmatprep.subr.bf16.mxu0 0
    %1152 = vmatpush1.bf16.msra.mxu0 0
    %1153 = vmatprep.subr.bf16.mxu0 0
    %1154 = vmatpush1.bf16.msra.mxu0 0
    %1155 = vmatprep.subr.bf16.mxu0 0
    %1156 = vmatpush1.bf16.msra.mxu0 0
    %1157 = vmatprep.subr.bf16.mxu0 0
    %1158 = vmatpush1.bf16.msra.mxu0 0
    %1159 = vmatprep.subr.bf16.mxu0 0
    %1160 = vmatpush1.bf16.msra.mxu0 0
    %1161 = vmatprep.subr.bf16.mxu0 0
    %1162 = vmatpush1.bf16.msra.mxu0 0
    %1163 = vmatprep.mubr.bf16.mxu0 0
    %1164 = vmatmul.mubr.bf16.gmra.mrb[0].mxu0 %v992
    %v1165 = vpop.f32.mrb[0].mxu0
    %v1166 = vadd.f32 %v1114, %v1165
    %v1167 = vpop.f32.mrb[0].mxu0
    %v1168 = vpop.f32.mrb[0].mxu0
    %v1169 = vpop.f32.mrb[0].mxu0
    %1170 = vdwg.mxu0
    %1171 = vmatprep.subr.bf16.mxu0 0
    %1172 = vmatpush1.bf16.msra.mxu0 %v917
    %1173 = vmatprep.subr.bf16.mxu0 0
    %1174 = vmatpush1.bf16.msra.mxu0 %v918
    %1175 = vmatprep.subr.bf16.mxu0 0
    %1176 = vmatpush1.bf16.msra.mxu0 0
    %1177 = vmatprep.subr.bf16.mxu0 0
    %1178 = vmatpush1.bf16.msra.mxu0 0
    %1179 = vmatprep.subr.bf16.mxu0 0
    %1180 = vmatpush1.bf16.msra.mxu0 0
    %1181 = vmatprep.subr.bf16.mxu0 0
    %1182 = vmatpush1.bf16.msra.mxu0 0
    %1183 = vmatprep.subr.bf16.mxu0 0
    %1184 = vmatpush1.bf16.msra.mxu0 0
    %1185 = vmatprep.subr.bf16.mxu0 0
    %1186 = vmatpush1.bf16.msra.mxu0 0
    %1187 = vmatprep.subr.bf16.mxu0 0
    %1188 = vmatpush1.bf16.msra.mxu0 0
    %1189 = vmatprep.subr.bf16.mxu0 0
    %1190 = vmatpush1.bf16.msra.mxu0 0
    %1191 = vmatprep.subr.bf16.mxu0 0
    %1192 = vmatpush1.bf16.msra.mxu0 0
    %1193 = vmatprep.subr.bf16.mxu0 0
    %1194 = vmatpush1.bf16.msra.mxu0 0
    %1195 = vmatprep.subr.bf16.mxu0 0
    %1196 = vmatpush1.bf16.msra.mxu0 0
    %1197 = vmatprep.subr.bf16.mxu0 0
    %1198 = vmatpush1.bf16.msra.mxu0 0
    %1199 = vmatprep.subr.bf16.mxu0 0
    %1200 = vmatpush1.bf16.msra.mxu0 0
    %1201 = vmatprep.subr.bf16.mxu0 0
    %1202 = vmatpush1.bf16.msra.mxu0 0
    %1203 = vmatprep.mubr.bf16.mxu0 0
    %1204 = vmatmul.mubr.bf16.gmra.mrb[0].mxu0 %v1077
    %v1205 = vpop.f32.mrb[0].mxu0
    %v1206 = vadd.f32 0.0, %v1205
    %v1207 = vpop.f32.mrb[0].mxu0
    %v1208 = vpop.f32.mrb[0].mxu0
    %v1209 = vpop.f32.mrb[0].mxu0
    %1210 = vdwg.mxu0
    %v1211 = vadd.f32 %v887, %v1206
    %v1212 = vxor.u32 %v1211, 2147483648
    %v1213 = vmul.f32 %v1212, 1.442695
    %v1214 = vpow.pop %v1213
    %v1215 = vadd.f32 %v1214, 1.0
    %v1216 = vrcp.pop %v1215
    %v1217 = vmul.f32 1.0, %v1216
    %v1218 = vtanh.pop %v1211
    %v1219 = vsel %vm38, %v1218, %v1217
    %v1220 = vmul.f32 %v1219, %v1053
    %1222 = vrot.lane.b32.xlu0 %v1219, 64
    %v1223 = vpop.permute.xlu0 %1222
    %v1225 = vmul.f32 %v1219, %v1223
    %1227 = vrot.lane.b32.xlu0 %v1225, 32
    %v1228 = vpop.permute.xlu0 %1227
    %v1230 = vadd.f32 %v1220, %v1228
    %v1231 = vtanh.pop %v1230
    %1233 = vrot.lane.b32.xlu0 %v1231, 64
    %v1234 = vpop.permute.xlu0 %1233
    %v1236 = vmul.f32 %v1219, %v1234
    %v1237 = vpack.c.bf16 %v1236, %v1236
    %1239 = vrot.lane.b32.xlu0 %v1237, 32
    %v1240 = vpop.permute.xlu0 %1239
    %v1245 = vunpack.c.l.b16 %v47
    %v1246 = vunpack.c.l.b16 %v48
    %v1247 = vunpack.c.l.b16 %v49
    %v1248 = vunpack.c.l.b16 %v50
    %v1249 = vpack.c.b16 %v1246, %v1245
    %v1250 = vpack.c.b16 %v1248, %v1247
    %v1254 = vsel %vm208, %v1240, 0
    %1256 = vmatprep.subr.bf16.mxu0 0
    %1257 = vmatpush1.bf16.msra.mxu0 %v1249
    %1258 = vmatprep.subr.bf16.mxu0 0
    %1259 = vmatpush1.bf16.msra.mxu0 %v1250
    %1260 = vmatprep.subr.bf16.mxu0 0
    %1261 = vmatpush1.bf16.msra.mxu0 0
    %1262 = vmatprep.subr.bf16.mxu0 0
    %1263 = vmatpush1.bf16.msra.mxu0 0
    %1264 = vmatprep.subr.bf16.mxu0 0
    %1265 = vmatpush1.bf16.msra.mxu0 0
    %1266 = vmatprep.subr.bf16.mxu0 0
    %1267 = vmatpush1.bf16.msra.mxu0 0
    %1268 = vmatprep.subr.bf16.mxu0 0
    %1269 = vmatpush1.bf16.msra.mxu0 0
    %1270 = vmatprep.subr.bf16.mxu0 0
    %1271 = vmatpush1.bf16.msra.mxu0 0
    %1272 = vmatprep.subr.bf16.mxu0 0
    %1273 = vmatpush1.bf16.msra.mxu0 0
    %1274 = vmatprep.subr.bf16.mxu0 0
    %1275 = vmatpush1.bf16.msra.mxu0 0
    %1276 = vmatprep.subr.bf16.mxu0 0
    %1277 = vmatpush1.bf16.msra.mxu0 0
    %1278 = vmatprep.subr.bf16.mxu0 0
    %1279 = vmatpush1.bf16.msra.mxu0 0
    %1280 = vmatprep.subr.bf16.mxu0 0
    %1281 = vmatpush1.bf16.msra.mxu0 0
    %1282 = vmatprep.subr.bf16.mxu0 0
    %1283 = vmatpush1.bf16.msra.mxu0 0
    %1284 = vmatprep.subr.bf16.mxu0 0
    %1285 = vmatpush1.bf16.msra.mxu0 0
    %1286 = vmatprep.subr.bf16.mxu0 0
    %1287 = vmatpush1.bf16.msra.mxu0 0
    %1288 = vmatprep.mubr.bf16.mxu0 0
    %1289 = vmatmul.mubr.bf16.gmra.mrb[0].mxu0 %v1254
    %v1290 = vpop.f32.mrb[0].mxu0
    %v1291 = vadd.f32 0.0, %v1290
    %v1292 = vpop.f32.mrb[0].mxu0
    %v1293 = vpop.f32.mrb[0].mxu0
    %v1294 = vpop.f32.mrb[0].mxu0
    %1295 = vdwg.mxu0
    %v1296 = vadd.f32 %v1166, %v1291
    %1297 = vmatprep.subr.bf16.mxu0 0
    %1298 = vmatpush1.bf16.msra.mxu0 %v917
    %1299 = vmatprep.subr.bf16.mxu0 0
    %1300 = vmatpush1.bf16.msra.mxu0 %v918
    %1301 = vmatprep.subr.bf16.mxu0 0
    %1302 = vmatpush1.bf16.msra.mxu0 0
    %1303 = vmatprep.subr.bf16.mxu0 0
    %1304 = vmatpush1.bf16.msra.mxu0 0
    %1305 = vmatprep.subr.bf16.mxu0 0
    %1306 = vmatpush1.bf16.msra.mxu0 0
    %1307 = vmatprep.subr.bf16.mxu0 0
    %1308 = vmatpush1.bf16.msra.mxu0 0
    %1309 = vmatprep.subr.bf16.mxu0 0
    %1310 = vmatpush1.bf16.msra.mxu0 0
    %1311 = vmatprep.subr.bf16.mxu0 0
    %1312 = vmatpush1.bf16.msra.mxu0 0
    %1313 = vmatprep.subr.bf16.mxu0 0
    %1314 = vmatpush1.bf16.msra.mxu0 0
    %1315 = vmatprep.subr.bf16.mxu0 0
    %1316 = vmatpush1.bf16.msra.mxu0 0
    %1317 = vmatprep.subr.bf16.mxu0 0
    %1318 = vmatpush1.bf16.msra.mxu0 0
    %1319 = vmatprep.subr.bf16.mxu0 0
    %1320 = vmatpush1.bf16.msra.mxu0 0
    %1321 = vmatprep.subr.bf16.mxu0 0
    %1322 = vmatpush1.bf16.msra.mxu0 0
    %1323 = vmatprep.subr.bf16.mxu0 0
    %1324 = vmatpush1.bf16.msra.mxu0 0
    %1325 = vmatprep.subr.bf16.mxu0 0
    %1326 = vmatpush1.bf16.msra.mxu0 0
    %1327 = vmatprep.subr.bf16.mxu0 0
    %1328 = vmatpush1.bf16.msra.mxu0 0
    %1329 = vmatprep.mubr.bf16.mxu0 0
    %1330 = vmatmul.mubr.bf16.gmra.mrb[0].mxu0 %v1254
    %v1331 = vpop.f32.mrb[0].mxu0
    %v1332 = vadd.f32 0.0, %v1331
    %v1333 = vpop.f32.mrb[0].mxu0
    %v1334 = vpop.f32.mrb[0].mxu0
    %v1335 = vpop.f32.mrb[0].mxu0
    %1336 = vdwg.mxu0
    %v1337 = vadd.f32 %v890, %v1332
    %v1338 = vxor.u32 %v1337, 2147483648
    %v1339 = vmul.f32 %v1338, 1.442695
    %v1340 = vpow.pop %v1339
    %v1341 = vadd.f32 %v1340, 1.0
    %v1342 = vrcp.pop %v1341
    %v1343 = vmul.f32 1.0, %v1342
    %v1344 = vtanh.pop %v1337
    %v1345 = vsel %vm38, %v1344, %v1343
    %v1346 = vmul.f32 %v1345, %v1230
    %1348 = vrot.lane.b32.xlu0 %v1345, 64
    %v1349 = vpop.permute.xlu0 %1348
    %v1351 = vmul.f32 %v1345, %v1349
    %1353 = vrot.lane.b32.xlu0 %v1351, 32
    %v1354 = vpop.permute.xlu0 %1353
    %v1356 = vadd.f32 %v1346, %v1354
    %v1357 = vtanh.pop %v1356
    %1359 = vrot.lane.b32.xlu0 %v1357, 64
    %v1360 = vpop.permute.xlu0 %1359
    %v1362 = vmul.f32 %v1345, %v1360
    %v1363 = vpack.c.bf16 %v1362, %v1362
    %1365 = vrot.lane.b32.xlu0 %v1363, 32
    %v1366 = vpop.permute.xlu0 %1365
    %v1371 = vunpack.c.l.b16 %v51
    %v1372 = vunpack.c.l.b16 %v52
    %v1373 = vunpack.c.l.b16 %v53
    %v1374 = vunpack.c.l.b16 %v54
    %v1375 = vpack.c.b16 %v1372, %v1371
    %v1376 = vpack.c.b16 %v1374, %v1373
    %v1380 = vsel %vm208, %v1366, 0
    %1382 = vmatprep.subr.bf16.mxu0 0
    %1383 = vmatpush1.bf16.msra.mxu0 %v1375
    %1384 = vmatprep.subr.bf16.mxu0 0
    %1385 = vmatpush1.bf16.msra.mxu0 %v1376
    %1386 = vmatprep.subr.bf16.mxu0 0
    %1387 = vmatpush1.bf16.msra.mxu0 0
    %1388 = vmatprep.subr.bf16.mxu0 0
    %1389 = vmatpush1.bf16.msra.mxu0 0
    %1390 = vmatprep.subr.bf16.mxu0 0
    %1391 = vmatpush1.bf16.msra.mxu0 0
    %1392 = vmatprep.subr.bf16.mxu0 0
    %1393 = vmatpush1.bf16.msra.mxu0 0
    %1394 = vmatprep.subr.bf16.mxu0 0
    %1395 = vmatpush1.bf16.msra.mxu0 0
    %1396 = vmatprep.subr.bf16.mxu0 0
    %1397 = vmatpush1.bf16.msra.mxu0 0
    %1398 = vmatprep.subr.bf16.mxu0 0
    %1399 = vmatpush1.bf16.msra.mxu0 0
    %1400 = vmatprep.subr.bf16.mxu0 0
    %1401 = vmatpush1.bf16.msra.mxu0 0
    %1402 = vmatprep.subr.bf16.mxu0 0
    %1403 = vmatpush1.bf16.msra.mxu0 0
    %1404 = vmatprep.subr.bf16.mxu0 0
    %1405 = vmatpush1.bf16.msra.mxu0 0
    %1406 = vmatprep.subr.bf16.mxu0 0
    %1407 = vmatpush1.bf16.msra.mxu0 0
    %1408 = vmatprep.subr.bf16.mxu0 0
    %1409 = vmatpush1.bf16.msra.mxu0 0
    %1410 = vmatprep.subr.bf16.mxu0 0
    %1411 = vmatpush1.bf16.msra.mxu0 0
    %1412 = vmatprep.subr.bf16.mxu0 0
    %1413 = vmatpush1.bf16.msra.mxu0 0
    %1414 = vmatprep.mubr.bf16.mxu0 0
    %1415 = vmatmul.mubr.bf16.gmra.mrb[0].mxu0 %v1380
    %v1416 = vpop.f32.mrb[0].mxu0
    %v1417 = vadd.f32 0.0, %v1416
    %v1418 = vpop.f32.mrb[0].mxu0
    %v1419 = vpop.f32.mrb[0].mxu0
    %v1420 = vpop.f32.mrb[0].mxu0
    %1421 = vdwg.mxu0
    %v1422 = vadd.f32 %v1296, %v1417
    %1423 = vmatprep.subr.bf16.mxu0 0
    %1424 = vmatpush1.bf16.msra.mxu0 %v917
    %1425 = vmatprep.subr.bf16.mxu0 0
    %1426 = vmatpush1.bf16.msra.mxu0 %v918
    %1427 = vmatprep.subr.bf16.mxu0 0
    %1428 = vmatpush1.bf16.msra.mxu0 0
    %1429 = vmatprep.subr.bf16.mxu0 0
    %1430 = vmatpush1.bf16.msra.mxu0 0
    %1431 = vmatprep.subr.bf16.mxu0 0
    %1432 = vmatpush1.bf16.msra.mxu0 0
    %1433 = vmatprep.subr.bf16.mxu0 0
    %1434 = vmatpush1.bf16.msra.mxu0 0
    %1435 = vmatprep.subr.bf16.mxu0 0
    %1436 = vmatpush1.bf16.msra.mxu0 0
    %1437 = vmatprep.subr.bf16.mxu0 0
    %1438 = vmatpush1.bf16.msra.mxu0 0
    %1439 = vmatprep.subr.bf16.mxu0 0
    %1440 = vmatpush1.bf16.msra.mxu0 0
    %1441 = vmatprep.subr.bf16.mxu0 0
    %1442 = vmatpush1.bf16.msra.mxu0 0
    %1443 = vmatprep.subr.bf16.mxu0 0
    %1444 = vmatpush1.bf16.msra.mxu0 0
    %1445 = vmatprep.subr.bf16.mxu0 0
    %1446 = vmatpush1.bf16.msra.mxu0 0
    %1447 = vmatprep.subr.bf16.mxu0 0
    %1448 = vmatpush1.bf16.msra.mxu0 0
    %1449 = vmatprep.subr.bf16.mxu0 0
    %1450 = vmatpush1.bf16.msra.mxu0 0
    %1451 = vmatprep.subr.bf16.mxu0 0
    %1452 = vmatpush1.bf16.msra.mxu0 0
    %1453 = vmatprep.subr.bf16.mxu0 0
    %1454 = vmatpush1.bf16.msra.mxu0 0
    %1455 = vmatprep.mubr.bf16.mxu0 0
    %1456 = vmatmul.mubr.bf16.gmra.mrb[0].mxu0 %v1380
    %v1457 = vpop.f32.mrb[0].mxu0
    %v1458 = vadd.f32 0.0, %v1457
    %v1459 = vpop.f32.mrb[0].mxu0
    %v1460 = vpop.f32.mrb[0].mxu0
    %v1461 = vpop.f32.mrb[0].mxu0
    %1462 = vdwg.mxu0
    %v1463 = vadd.f32 %v895, %v1458
    %v1464 = vxor.u32 %v1463, 2147483648
    %v1465 = vmul.f32 %v1464, 1.442695
    %v1466 = vpow.pop %v1465
    %v1467 = vadd.f32 %v1466, 1.0
    %v1468 = vrcp.pop %v1467
    %v1469 = vmul.f32 1.0, %v1468
    %v1470 = vtanh.pop %v1463
    %v1471 = vsel %vm38, %v1470, %v1469
    %v1472 = vmul.f32 %v1471, %v1356
    %1474 = vrot.lane.b32.xlu0 %v1471, 64
    %v1475 = vpop.permute.xlu0 %1474
    %v1477 = vmul.f32 %v1471, %v1475
    %1479 = vrot.lane.b32.xlu0 %v1477, 32
    %v1480 = vpop.permute.xlu0 %1479
    %v1482 = vadd.f32 %v1472, %v1480
    %v1483 = vtanh.pop %v1482
    %1485 = vrot.lane.b32.xlu0 %v1483, 64
    %v1486 = vpop.permute.xlu0 %1485
    %v1488 = vmul.f32 %v1471, %v1486
    %v1489 = vpack.c.bf16 %v1488, %v1488
    %1491 = vrot.lane.b32.xlu0 %v1489, 32
    %v1492 = vpop.permute.xlu0 %1491
    %v1497 = vunpack.c.l.b16 %v55
    %v1498 = vunpack.c.l.b16 %v56
    %v1499 = vunpack.c.l.b16 %v57
    %v1500 = vunpack.c.l.b16 %v58
    %v1501 = vpack.c.b16 %v1498, %v1497
    %v1502 = vpack.c.b16 %v1500, %v1499
    %v1506 = vsel %vm208, %v1492, 0
    %1508 = vmatprep.subr.bf16.mxu0 0
    %1509 = vmatpush1.bf16.msra.mxu0 %v1501
    %1510 = vmatprep.subr.bf16.mxu0 0
    %1511 = vmatpush1.bf16.msra.mxu0 %v1502
    %1512 = vmatprep.subr.bf16.mxu0 0
    %1513 = vmatpush1.bf16.msra.mxu0 0
    %1514 = vmatprep.subr.bf16.mxu0 0
    %1515 = vmatpush1.bf16.msra.mxu0 0
    %1516 = vmatprep.subr.bf16.mxu0 0
    %1517 = vmatpush1.bf16.msra.mxu0 0
    %1518 = vmatprep.subr.bf16.mxu0 0
    %1519 = vmatpush1.bf16.msra.mxu0 0
    %1520 = vmatprep.subr.bf16.mxu0 0
    %1521 = vmatpush1.bf16.msra.mxu0 0
    %1522 = vmatprep.subr.bf16.mxu0 0
    %1523 = vmatpush1.bf16.msra.mxu0 0
    %1524 = vmatprep.subr.bf16.mxu0 0
    %1525 = vmatpush1.bf16.msra.mxu0 0
    %1526 = vmatprep.subr.bf16.mxu0 0
    %1527 = vmatpush1.bf16.msra.mxu0 0
    %1528 = vmatprep.subr.bf16.mxu0 0
    %1529 = vmatpush1.bf16.msra.mxu0 0
    %1530 = vmatprep.subr.bf16.mxu0 0
    %1531 = vmatpush1.bf16.msra.mxu0 0
    %1532 = vmatprep.subr.bf16.mxu0 0
    %1533 = vmatpush1.bf16.msra.mxu0 0
    %1534 = vmatprep.subr.bf16.mxu0 0
    %1535 = vmatpush1.bf16.msra.mxu0 0
    %1536 = vmatprep.subr.bf16.mxu0 0
    %1537 = vmatpush1.bf16.msra.mxu0 0
    %1538 = vmatprep.subr.bf16.mxu0 0
    %1539 = vmatpush1.bf16.msra.mxu0 0
    %1540 = vmatprep.mubr.bf16.mxu0 0
    %1541 = vmatmul.mubr.bf16.gmra.mrb[0].mxu0 %v1506
    %v1542 = vpop.f32.mrb[0].mxu0
    %v1543 = vadd.f32 0.0, %v1542
    %v1544 = vpop.f32.mrb[0].mxu0
    %v1545 = vpop.f32.mrb[0].mxu0
    %v1546 = vpop.f32.mrb[0].mxu0
    %1547 = vdwg.mxu0
    %v1548 = vadd.f32 %v1422, %v1543
    %1549 = vmatprep.subr.bf16.mxu0 0
    %1550 = vmatpush1.bf16.msra.mxu0 %v917
    %1551 = vmatprep.subr.bf16.mxu0 0
    %1552 = vmatpush1.bf16.msra.mxu0 %v918
    %1553 = vmatprep.subr.bf16.mxu0 0
    %1554 = vmatpush1.bf16.msra.mxu0 0
    %1555 = vmatprep.subr.bf16.mxu0 0
    %1556 = vmatpush1.bf16.msra.mxu0 0
    %1557 = vmatprep.subr.bf16.mxu0 0
    %1558 = vmatpush1.bf16.msra.mxu0 0
    %1559 = vmatprep.subr.bf16.mxu0 0
    %1560 = vmatpush1.bf16.msra.mxu0 0
    %1561 = vmatprep.subr.bf16.mxu0 0
    %1562 = vmatpush1.bf16.msra.mxu0 0
    %1563 = vmatprep.subr.bf16.mxu0 0
    %1564 = vmatpush1.bf16.msra.mxu0 0
    %1565 = vmatprep.subr.bf16.mxu0 0
    %1566 = vmatpush1.bf16.msra.mxu0 0
    %1567 = vmatprep.subr.bf16.mxu0 0
    %1568 = vmatpush1.bf16.msra.mxu0 0
    %1569 = vmatprep.subr.bf16.mxu0 0
    %1570 = vmatpush1.bf16.msra.mxu0 0
    %1571 = vmatprep.subr.bf16.mxu0 0
    %1572 = vmatpush1.bf16.msra.mxu0 0
    %1573 = vmatprep.subr.bf16.mxu0 0
    %1574 = vmatpush1.bf16.msra.mxu0 0
    %1575 = vmatprep.subr.bf16.mxu0 0
    %1576 = vmatpush1.bf16.msra.mxu0 0
    %1577 = vmatprep.subr.bf16.mxu0 0
    %1578 = vmatpush1.bf16.msra.mxu0 0
    %1579 = vmatprep.subr.bf16.mxu0 0
    %1580 = vmatpush1.bf16.msra.mxu0 0
    %1581 = vmatprep.mubr.bf16.mxu0 0
    %1582 = vmatmul.mubr.bf16.gmra.mrb[0].mxu0 %v1506
    %v1583 = vpop.f32.mrb[0].mxu0
    %v1584 = vadd.f32 0.0, %v1583
    %v1585 = vpop.f32.mrb[0].mxu0
    %v1586 = vpop.f32.mrb[0].mxu0
    %v1587 = vpop.f32.mrb[0].mxu0
    %1588 = vdwg.mxu0
    %v1589 = vadd.f32 %v898, %v1584
    %v1590 = vxor.u32 %v1589, 2147483648
    %v1591 = vmul.f32 %v1590, 1.442695
    %v1592 = vpow.pop %v1591
    %v1593 = vadd.f32 %v1592, 1.0
    %v1594 = vrcp.pop %v1593
    %v1595 = vmul.f32 1.0, %v1594
    %v1596 = vtanh.pop %v1589
    %v1597 = vsel %vm38, %v1596, %v1595
    %v1598 = vmul.f32 %v1597, %v1482
    %1600 = vrot.lane.b32.xlu0 %v1597, 64
    %v1601 = vpop.permute.xlu0 %1600
    %v1603 = vmul.f32 %v1597, %v1601
    %1605 = vrot.lane.b32.xlu0 %v1603, 32
    %v1606 = vpop.permute.xlu0 %1605
    %v1608 = vadd.f32 %v1598, %v1606
    %v1609 = vtanh.pop %v1608
    %1611 = vrot.lane.b32.xlu0 %v1609, 64
    %v1612 = vpop.permute.xlu0 %1611
    %v1614 = vmul.f32 %v1597, %v1612
    %v1615 = vpack.c.bf16 %v1614, %v1614
    %1617 = vrot.lane.b32.xlu0 %v1615, 32
    %v1618 = vpop.permute.xlu0 %1617
    %v1623 = vunpack.c.l.b16 %v59
    %v1624 = vunpack.c.l.b16 %v60
    %v1625 = vunpack.c.l.b16 %v61
    %v1626 = vunpack.c.l.b16 %v62
    %v1627 = vpack.c.b16 %v1624, %v1623
    %v1628 = vpack.c.b16 %v1626, %v1625
    %v1632 = vsel %vm208, %v1618, 0
    %1634 = vmatprep.subr.bf16.mxu0 0
    %1635 = vmatpush1.bf16.msra.mxu0 %v1627
    %1636 = vmatprep.subr.bf16.mxu0 0
    %1637 = vmatpush1.bf16.msra.mxu0 %v1628
    %1638 = vmatprep.subr.bf16.mxu0 0
    %1639 = vmatpush1.bf16.msra.mxu0 0
    %1640 = vmatprep.subr.bf16.mxu0 0
    %1641 = vmatpush1.bf16.msra.mxu0 0
    %1642 = vmatprep.subr.bf16.mxu0 0
    %1643 = vmatpush1.bf16.msra.mxu0 0
    %1644 = vmatprep.subr.bf16.mxu0 0
    %1645 = vmatpush1.bf16.msra.mxu0 0
    %1646 = vmatprep.subr.bf16.mxu0 0
    %1647 = vmatpush1.bf16.msra.mxu0 0
    %1648 = vmatprep.subr.bf16.mxu0 0
    %1649 = vmatpush1.bf16.msra.mxu0 0
    %1650 = vmatprep.subr.bf16.mxu0 0
    %1651 = vmatpush1.bf16.msra.mxu0 0
    %1652 = vmatprep.subr.bf16.mxu0 0
    %1653 = vmatpush1.bf16.msra.mxu0 0
    %1654 = vmatprep.subr.bf16.mxu0 0
    %1655 = vmatpush1.bf16.msra.mxu0 0
    %1656 = vmatprep.subr.bf16.mxu0 0
    %1657 = vmatpush1.bf16.msra.mxu0 0
    %1658 = vmatprep.subr.bf16.mxu0 0
    %1659 = vmatpush1.bf16.msra.mxu0 0
    %1660 = vmatprep.subr.bf16.mxu0 0
    %1661 = vmatpush1.bf16.msra.mxu0 0
    %1662 = vmatprep.subr.bf16.mxu0 0
    %1663 = vmatpush1.bf16.msra.mxu0 0
    %1664 = vmatprep.subr.bf16.mxu0 0
    %1665 = vmatpush1.bf16.msra.mxu0 0
    %1666 = vmatprep.mubr.bf16.mxu0 0
    %1667 = vmatmul.mubr.bf16.gmra.mrb[0].mxu0 %v1632
    %v1668 = vpop.f32.mrb[0].mxu0
    %v1669 = vadd.f32 0.0, %v1668
    %v1670 = vpop.f32.mrb[0].mxu0
    %v1671 = vpop.f32.mrb[0].mxu0
    %v1672 = vpop.f32.mrb[0].mxu0
    %1673 = vdwg.mxu0
    %v1674 = vadd.f32 %v1548, %v1669
    %1675 = vmatprep.subr.bf16.mxu0 0
    %1676 = vmatpush1.bf16.msra.mxu0 %v917
    %1677 = vmatprep.subr.bf16.mxu0 0
    %1678 = vmatpush1.bf16.msra.mxu0 %v918
    %1679 = vmatprep.subr.bf16.mxu0 0
    %1680 = vmatpush1.bf16.msra.mxu0 0
    %1681 = vmatprep.subr.bf16.mxu0 0
    %1682 = vmatpush1.bf16.msra.mxu0 0
    %1683 = vmatprep.subr.bf16.mxu0 0
    %1684 = vmatpush1.bf16.msra.mxu0 0
    %1685 = vmatprep.subr.bf16.mxu0 0
    %1686 = vmatpush1.bf16.msra.mxu0 0
    %1687 = vmatprep.subr.bf16.mxu0 0
    %1688 = vmatpush1.bf16.msra.mxu0 0
    %1689 = vmatprep.subr.bf16.mxu0 0
    %1690 = vmatpush1.bf16.msra.mxu0 0
    %1691 = vmatprep.subr.bf16.mxu0 0
    %1692 = vmatpush1.bf16.msra.mxu0 0
    %1693 = vmatprep.subr.bf16.mxu0 0
    %1694 = vmatpush1.bf16.msra.mxu0 0
    %1695 = vmatprep.subr.bf16.mxu0 0
    %1696 = vmatpush1.bf16.msra.mxu0 0
    %1697 = vmatprep.subr.bf16.mxu0 0
    %1698 = vmatpush1.bf16.msra.mxu0 0
    %1699 = vmatprep.subr.bf16.mxu0 0
    %1700 = vmatpush1.bf16.msra.mxu0 0
    %1701 = vmatprep.subr.bf16.mxu0 0
    %1702 = vmatpush1.bf16.msra.mxu0 0
    %1703 = vmatprep.subr.bf16.mxu0 0
    %1704 = vmatpush1.bf16.msra.mxu0 0
    %1705 = vmatprep.subr.bf16.mxu0 0
    %1706 = vmatpush1.bf16.msra.mxu0 0
    %1707 = vmatprep.mubr.bf16.mxu0 0
    %1708 = vmatmul.mubr.bf16.gmra.mrb[0].mxu0 %v1632
    %v1709 = vpop.f32.mrb[0].mxu0
    %v1710 = vadd.f32 0.0, %v1709
    %v1711 = vpop.f32.mrb[0].mxu0
    %v1712 = vpop.f32.mrb[0].mxu0
    %v1713 = vpop.f32.mrb[0].mxu0
    %1714 = vdwg.mxu0
    %v1715 = vadd.f32 %v903, %v1710
    %v1716 = vxor.u32 %v1715, 2147483648
    %v1717 = vmul.f32 %v1716, 1.442695
    %v1718 = vpow.pop %v1717
    %v1719 = vadd.f32 %v1718, 1.0
    %v1720 = vrcp.pop %v1719
    %v1721 = vmul.f32 1.0, %v1720
    %v1722 = vtanh.pop %v1715
    %v1723 = vsel %vm38, %v1722, %v1721
    %v1724 = vmul.f32 %v1723, %v1608
    %1726 = vrot.lane.b32.xlu0 %v1723, 64
    %v1727 = vpop.permute.xlu0 %1726
    %v1729 = vmul.f32 %v1723, %v1727
    %1731 = vrot.lane.b32.xlu0 %v1729, 32
    %v1732 = vpop.permute.xlu0 %1731
    %v1734 = vadd.f32 %v1724, %v1732
    %v1735 = vtanh.pop %v1734
    %1737 = vrot.lane.b32.xlu0 %v1735, 64
    %v1738 = vpop.permute.xlu0 %1737
    %v1740 = vmul.f32 %v1723, %v1738
    %v1741 = vpack.c.bf16 %v1740, %v1740
    %1743 = vrot.lane.b32.xlu0 %v1741, 32
    %v1744 = vpop.permute.xlu0 %1743
    %v1749 = vunpack.c.l.b16 %v63
    %v1750 = vunpack.c.l.b16 %v64
    %v1751 = vunpack.c.l.b16 %v65
    %v1752 = vunpack.c.l.b16 %v66
    %v1753 = vpack.c.b16 %v1750, %v1749
    %v1754 = vpack.c.b16 %v1752, %v1751
    %v1758 = vsel %vm208, %v1744, 0
    %1760 = vmatprep.subr.bf16.mxu0 0
    %1761 = vmatpush1.bf16.msra.mxu0 %v1753
    %1762 = vmatprep.subr.bf16.mxu0 0
    %1763 = vmatpush1.bf16.msra.mxu0 %v1754
    %1764 = vmatprep.subr.bf16.mxu0 0
    %1765 = vmatpush1.bf16.msra.mxu0 0
    %1766 = vmatprep.subr.bf16.mxu0 0
    %1767 = vmatpush1.bf16.msra.mxu0 0
    %1768 = vmatprep.subr.bf16.mxu0 0
    %1769 = vmatpush1.bf16.msra.mxu0 0
    %1770 = vmatprep.subr.bf16.mxu0 0
    %1771 = vmatpush1.bf16.msra.mxu0 0
    %1772 = vmatprep.subr.bf16.mxu0 0
    %1773 = vmatpush1.bf16.msra.mxu0 0
    %1774 = vmatprep.subr.bf16.mxu0 0
    %1775 = vmatpush1.bf16.msra.mxu0 0
    %1776 = vmatprep.subr.bf16.mxu0 0
    %1777 = vmatpush1.bf16.msra.mxu0 0
    %1778 = vmatprep.subr.bf16.mxu0 0
    %1779 = vmatpush1.bf16.msra.mxu0 0
    %1780 = vmatprep.subr.bf16.mxu0 0
    %1781 = vmatpush1.bf16.msra.mxu0 0
    %1782 = vmatprep.subr.bf16.mxu0 0
    %1783 = vmatpush1.bf16.msra.mxu0 0
    %1784 = vmatprep.subr.bf16.mxu0 0
    %1785 = vmatpush1.bf16.msra.mxu0 0
    %1786 = vmatprep.subr.bf16.mxu0 0
    %1787 = vmatpush1.bf16.msra.mxu0 0
    %1788 = vmatprep.subr.bf16.mxu0 0
    %1789 = vmatpush1.bf16.msra.mxu0 0
    %1790 = vmatprep.subr.bf16.mxu0 0
    %1791 = vmatpush1.bf16.msra.mxu0 0
    %1792 = vmatprep.mubr.bf16.mxu0 0
    %1793 = vmatmul.mubr.bf16.gmra.mrb[0].mxu0 %v1758
    %v1794 = vpop.f32.mrb[0].mxu0
    %v1795 = vadd.f32 0.0, %v1794
    %v1796 = vpop.f32.mrb[0].mxu0
    %v1797 = vpop.f32.mrb[0].mxu0
    %v1798 = vpop.f32.mrb[0].mxu0
    %1799 = vdwg.mxu0
    %v1800 = vadd.f32 %v1674, %v1795
    %1801 = vmatprep.subr.bf16.mxu0 0
    %1802 = vmatpush1.bf16.msra.mxu0 %v917
    %1803 = vmatprep.subr.bf16.mxu0 0
    %1804 = vmatpush1.bf16.msra.mxu0 %v918
    %1805 = vmatprep.subr.bf16.mxu0 0
    %1806 = vmatpush1.bf16.msra.mxu0 0
    %1807 = vmatprep.subr.bf16.mxu0 0
    %1808 = vmatpush1.bf16.msra.mxu0 0
    %1809 = vmatprep.subr.bf16.mxu0 0
    %1810 = vmatpush1.bf16.msra.mxu0 0
    %1811 = vmatprep.subr.bf16.mxu0 0
    %1812 = vmatpush1.bf16.msra.mxu0 0
    %1813 = vmatprep.subr.bf16.mxu0 0
    %1814 = vmatpush1.bf16.msra.mxu0 0
    %1815 = vmatprep.subr.bf16.mxu0 0
    %1816 = vmatpush1.bf16.msra.mxu0 0
    %1817 = vmatprep.subr.bf16.mxu0 0
    %1818 = vmatpush1.bf16.msra.mxu0 0
    %1819 = vmatprep.subr.bf16.mxu0 0
    %1820 = vmatpush1.bf16.msra.mxu0 0
    %1821 = vmatprep.subr.bf16.mxu0 0
    %1822 = vmatpush1.bf16.msra.mxu0 0
    %1823 = vmatprep.subr.bf16.mxu0 0
    %1824 = vmatpush1.bf16.msra.mxu0 0
    %1825 = vmatprep.subr.bf16.mxu0 0
    %1826 = vmatpush1.bf16.msra.mxu0 0
    %1827 = vmatprep.subr.bf16.mxu0 0
    %1828 = vmatpush1.bf16.msra.mxu0 0
    %1829 = vmatprep.subr.bf16.mxu0 0
    %1830 = vmatpush1.bf16.msra.mxu0 0
    %1831 = vmatprep.subr.bf16.mxu0 0
    %1832 = vmatpush1.bf16.msra.mxu0 0
    %1833 = vmatprep.mubr.bf16.mxu0 0
    %1834 = vmatmul.mubr.bf16.gmra.mrb[0].mxu0 %v1758
    %v1835 = vpop.f32.mrb[0].mxu0
    %v1836 = vadd.f32 0.0, %v1835
    %v1837 = vpop.f32.mrb[0].mxu0
    %v1838 = vpop.f32.mrb[0].mxu0
    %v1839 = vpop.f32.mrb[0].mxu0
    %1840 = vdwg.mxu0
    %v1841 = vadd.f32 %v906, %v1836
    %v1842 = vxor.u32 %v1841, 2147483648
    %v1843 = vmul.f32 %v1842, 1.442695
    %v1844 = vpow.pop %v1843
    %v1845 = vadd.f32 %v1844, 1.0
    %v1846 = vrcp.pop %v1845
    %v1847 = vmul.f32 1.0, %v1846
    %v1848 = vtanh.pop %v1841
    %v1849 = vsel %vm38, %v1848, %v1847
    %v1850 = vmul.f32 %v1849, %v1734
    %1852 = vrot.lane.b32.xlu0 %v1849, 64
    %v1853 = vpop.permute.xlu0 %1852
    %v1855 = vmul.f32 %v1849, %v1853
    %1857 = vrot.lane.b32.xlu0 %v1855, 32
    %v1858 = vpop.permute.xlu0 %1857
    %v1860 = vadd.f32 %v1850, %v1858
    %v1861 = vtanh.pop %v1860
    %1863 = vrot.lane.b32.xlu0 %v1861, 64
    %v1864 = vpop.permute.xlu0 %1863
    %v1866 = vmul.f32 %v1849, %v1864
    %v1867 = vpack.c.bf16 %v1866, %v1866
    %1869 = vrot.lane.b32.xlu0 %v1867, 32
    %v1870 = vpop.permute.xlu0 %1869
    %v1875 = vunpack.c.l.b16 %v67
    %v1876 = vunpack.c.l.b16 %v68
    %v1877 = vunpack.c.l.b16 %v69
    %v1878 = vunpack.c.l.b16 %v70
    %v1879 = vpack.c.b16 %v1876, %v1875
    %v1880 = vpack.c.b16 %v1878, %v1877
    %v1884 = vsel %vm208, %v1870, 0
    %1886 = vmatprep.subr.bf16.mxu0 0
    %1887 = vmatpush1.bf16.msra.mxu0 %v1879
    %1888 = vmatprep.subr.bf16.mxu0 0
    %1889 = vmatpush1.bf16.msra.mxu0 %v1880
    %1890 = vmatprep.subr.bf16.mxu0 0
    %1891 = vmatpush1.bf16.msra.mxu0 0
    %1892 = vmatprep.subr.bf16.mxu0 0
    %1893 = vmatpush1.bf16.msra.mxu0 0
    %1894 = vmatprep.subr.bf16.mxu0 0
    %1895 = vmatpush1.bf16.msra.mxu0 0
    %1896 = vmatprep.subr.bf16.mxu0 0
    %1897 = vmatpush1.bf16.msra.mxu0 0
    %1898 = vmatprep.subr.bf16.mxu0 0
    %1899 = vmatpush1.bf16.msra.mxu0 0
    %1900 = vmatprep.subr.bf16.mxu0 0
    %1901 = vmatpush1.bf16.msra.mxu0 0
    %1902 = vmatprep.subr.bf16.mxu0 0
    %1903 = vmatpush1.bf16.msra.mxu0 0
    %1904 = vmatprep.subr.bf16.mxu0 0
    %1905 = vmatpush1.bf16.msra.mxu0 0
    %1906 = vmatprep.subr.bf16.mxu0 0
    %1907 = vmatpush1.bf16.msra.mxu0 0
    %1908 = vmatprep.subr.bf16.mxu0 0
    %1909 = vmatpush1.bf16.msra.mxu0 0
    %1910 = vmatprep.subr.bf16.mxu0 0
    %1911 = vmatpush1.bf16.msra.mxu0 0
    %1912 = vmatprep.subr.bf16.mxu0 0
    %1913 = vmatpush1.bf16.msra.mxu0 0
    %1914 = vmatprep.subr.bf16.mxu0 0
    %1915 = vmatpush1.bf16.msra.mxu0 0
    %1916 = vmatprep.subr.bf16.mxu0 0
    %1917 = vmatpush1.bf16.msra.mxu0 0
    %1918 = vmatprep.mubr.bf16.mxu0 0
    %1919 = vmatmul.mubr.bf16.gmra.mrb[0].mxu0 %v1884
    %v1920 = vpop.f32.mrb[0].mxu0
    %v1921 = vadd.f32 0.0, %v1920
    %v1922 = vpop.f32.mrb[0].mxu0
    %v1923 = vpop.f32.mrb[0].mxu0
    %v1924 = vpop.f32.mrb[0].mxu0
    %1925 = vdwg.mxu0
    %v1926 = vadd.f32 %v1800, %v1921
    %v1927 = vld [vmem:[%s8] sm:$0x1]
    %v1929 = vlaneseq
    %v1930 = vshrl.u32 %v1929, 7
    %v1931 = vsub.s32 0, %v1930
    %v1932 = vrot.slane %v1927, %v1931
    %v1934 = vadd.f32 %v1926, %v1932
    %1935 = vst.msk [vmem:[#allocation2] sm:$0xff] %vm118, %v1934
    // Predicated region
    $region38: #{tpu_custom_call.1} parent=1 // pred_check
      _
    $region39: #{tpu_custom_call.1} parent=1 // pred_check_branch
      %1937 = sbr.rel (0) target = $region41
    $region40: #{tpu_custom_call.1} parent=1 // pred_region
      %s1939 = ssub.s32 128, 128
      %1940 = vsyncadd [#allocation3], %s1939
      %s1942 = sshll.u32 [#allocation2], 4
      %s1943 = int_to_ptr.vmem [resolvable:$true] %s1942
      %1945 = dma.vmem_to_hbm [thread:$0]  %s1943, 128, %s9, [#allocation3]
    $region41: #{tpu_custom_call.1} parent=1 // pred_fallthru
      _
    // Predicated region
    $region42: #{tpu_custom_call.1} parent=1 // pred_check
      _
    $region43: #{tpu_custom_call.1} parent=1 // pred_check_branch
      %1947 = sbr.rel (0) target = $region45
    $region44: #{tpu_custom_call.1} parent=1 // pred_region
      %1948 = dma.done [#allocation3], 128
    $region45: #{tpu_custom_call.1} parent=1 // pred_fallthru
      _
    %1949 = vsyncpa [#allocation3], 1

</llo_original>
